<compile_context>
chip_gen: v5e
topology: v5e:2x2
jax: 0.10.0
libtpu: 0.0.40
codegen_flags: <defaults>
</compile_context>

<pallas_src>
import numpy as np
import jax
import jax.numpy as jnp
from jax.experimental import pallas as pl
from jax.experimental.pallas import tpu as pltpu

HIDDEN_DIM = 64
NN_IN = 7
ACT_DIM = 2
NN_OUT_F = 3
NN_OUT_G = 6
NN_OUT = NN_OUT_F + NN_OUT_G          # 9
XA_DIM = NN_IN + ACT_DIM + 1          # 10 : [x | act | 1]
DT = 0.02
NEG_SLOPE = 0.01                      # torch F.leaky_relu default


def _leaky_relu(h):
    # Exact for 0 < slope < 1; mul+max instead of cmp+select+mul.
    return jnp.maximum(h, NEG_SLOPE * h)


def _dot(a, w):
    # Cast activation to the weight dtype at the matmul (bf16 by default),
    # always accumulate in float32 on the MXU.
    return jnp.dot(a.astype(w.dtype), w, preferred_element_type=jnp.float32)


def drone2d_kernel(xa_ref, w0, b0, w1, b1, w2, b2, wo, bo, s3, q, out_ref):
    xa = xa_ref[...]                       # (TB, 10) f32 : [x | act | 1]
    x_old = xa[:, :NN_IN]                  # (TB, 7)
    act1 = xa[:, NN_IN:]                   # (TB, 3)  = [a0, a1, 1]

    # Fused f||g MLP: 3 leaky-relu 128-wide hidden layers + fused 9-wide head.
    h = _leaky_relu(_dot(x_old, w0[...]) + b0[...])
    h = _leaky_relu(_dot(h, w1[...]) + b1[...])
    h = _leaky_relu(_dot(h, w2[...]) + b2[...])
    h9 = _dot(h, wo[...]) + bo[...]        # (TB, 9) = [x_f | x_g]

    # xdot = x_f + bmm(x_g.reshape(B,3,2), act)
    #      = (h9 * [1,1,1, a0,a1, a0,a1, a0,a1]) @ Q
    # NOTE: these two tiny matmuls could move to VPU/XLU if a bundle dump
    # shows the MXU (not VALU) as the binding slot.
    mult = jnp.dot(act1, s3[...], preferred_element_type=jnp.float32)       # (TB, 9)
    xdot = jnp.dot(h9 * mult, q[...], preferred_element_type=jnp.float32)   # (TB, 3)

    # Discrete-time dynamics update (f32).
    theta = x_old[:, 6:7]
    c = jnp.cos(DT * theta)
    s = jnp.sin(DT * theta)
    out01 = x_old[:, 0:2] + DT * x_old[:, 4:6]
    out2 = x_old[:, 2:3] * c + x_old[:, 3:4] * s
    out3 = x_old[:, 3:4] * c - x_old[:, 2:3] * s
    out456 = x_old[:, 4:7] + DT * xdot
    # Single full-row store instead of four masked lane-sliced stores.
    out_ref[...] = jnp.concatenate([out01, out2, out3, out456], axis=-1)


def init_params(key):
    """Synthetic per-branch parameters (same shapes as the torch module)."""
    def linear(k, din, dout, scale=0.1):
        kw, kb = jax.random.split(k)
        w = scale * jax.random.normal(kw, (din, dout), jnp.float32)
        b = scale * jax.random.normal(kb, (1, dout), jnp.float32)
        return w, b

    keys = jax.random.split(key, 8)
    params = []
    params += linear(keys[0], NN_IN, HIDDEN_DIM)          # f branch
    params += linear(keys[1], HIDDEN_DIM, HIDDEN_DIM)
    params += linear(keys[2], HIDDEN_DIM, HIDDEN_DIM)
    params += linear(keys[3], HIDDEN_DIM, NN_OUT_F)
    params += linear(keys[4], NN_IN, HIDDEN_DIM)          # g branch
    params += linear(keys[5], HIDDEN_DIM, HIDDEN_DIM)
    params += linear(keys[6], HIDDEN_DIM, HIDDEN_DIM)
    params += linear(keys[7], HIDDEN_DIM, NN_OUT_G)
    return tuple(params)


def fuse_params(params, weight_dtype=jnp.bfloat16):
    """Host-side prep: fuse f/g into one 128-wide MLP + constant pairing mats.

    Default weight_dtype is bf16 (the MXU is bf16-native on every TPU
    generation); accumulation is still f32 inside the kernel.
    """
    (wf0, bf0, wf1, bf1, wf2, bf2, wfo, bfo,
     wg0, bg0, wg1, bg1, wg2, bg2, wgo, bgo) = params

    def blockdiag(wa, wb):
        top = jnp.concatenate(
            [wa, jnp.zeros((wa.shape[0], wb.shape[1]), jnp.float32)], axis=1)
        bot = jnp.concatenate(
            [jnp.zeros((wb.shape[0], wa.shape[1]), jnp.float32), wb], axis=1)
        return jnp.concatenate([top, bot], axis=0)

    w0 = jnp.concatenate([wf0, wg0], axis=1)              # (7, 128)
    b0 = jnp.concatenate([bf0, bg0], axis=1)              # (1, 128)
    w1 = blockdiag(wf1, wg1)                              # (128, 128)
    b1 = jnp.concatenate([bf1, bg1], axis=1)
    w2 = blockdiag(wf2, wg2)                              # (128, 128)
    b2 = jnp.concatenate([bf2, bg2], axis=1)
    wo = blockdiag(wfo, wgo)                              # (128, 9)
    bo = jnp.concatenate([bfo, bgo], axis=1)              # (1, 9)

    # Constant 0/1 matrices for the bmm-as-matmul trick (act1 = [a0, a1, 1]):
    #   mult = act1 @ S3 = [1,1,1, a0,a1, a0,a1, a0,a1] ; xdot = (h9*mult) @ Q
    s3 = np.zeros((3, NN_OUT), np.float32)
    s3[0, NN_OUT_F + 0::2] = 1.0       # a0 scales x_g columns 0,2,4
    s3[1, NN_OUT_F + 1::2] = 1.0       # a1 scales x_g columns 1,3,5
    s3[2, :NN_OUT_F] = 1.0             # x_f columns pass through unscaled
    q = np.zeros((NN_OUT, NN_OUT_F), np.float32)
    for i in range(NN_OUT_F):
        q[i, i] = 1.0
        q[NN_OUT_F + 2 * i, i] = 1.0
        q[NN_OUT_F + 2 * i + 1, i] = 1.0

    weights = [w.astype(weight_dtype) for w in (w0, w1, w2, wo)]
    # Biases and pairing constants stay f32 (added after the f32 accumulate).
    return (weights[0], b0, weights[1], b1, weights[2], b2, weights[3], bo,
            jnp.asarray(s3), jnp.asarray(q))


def _round_up(n, m):
    return ((n + m - 1) // m) * m


def drone2d_forward(x, act, fused_params, *, block_b=4096):
    # torch-style 1-D -> 2-D normalization.
    if x.ndim == 1:
        x = x[None, :]
    if act.ndim == 1:
        act = act[None, :]
    # TODO(synk): the torch (3-D x, 2-D act) broadcast path (act.unsqueeze(1))
    # is not implemented; only 1-D/2-D inputs are supported.
    x = x.astype(jnp.float32)
    act = act.astype(jnp.float32)
    B = x.shape[0]

    # Single batched operand [x | act | 1]: one batched DMA per step; the
    # trailing 1 folds the old ones_f constant into the S3 pairing matrix.
    xa = jnp.concatenate([x, act, jnp.ones((B, 1), jnp.float32)], axis=-1)

    b8 = _round_up(B, 8)
    tb = min(_round_up(block_b, 8), b8)
    # v7x megacore: keep the "parallel" batch grid at >=2 steps so both
    # TensorCores get work (costs ~0.35us extra on single-TC generations).
    if b8 >= 16 and tb >= b8:
        tb = _round_up((b8 + 1) // 2, 8)
    b_pad = _round_up(b8, tb)
    if b_pad != B:
        xa = jnp.pad(xa, ((0, b_pad - B), (0, 0)))
    grid = (b_pad // tb,)

    def run(use_buffered):
        def const_spec(p):
            # Weights/constants: same block every grid step -> VMEM-resident;
            # single-buffered (they never change) when supported.
            if use_buffered:
                return pl.BlockSpec(p.shape, lambda i: (0, 0),
                                    pipeline_mode=pl.Buffered(1))
            return pl.BlockSpec(p.shape, lambda i: (0, 0))

        out = pl.pallas_call(
            drone2d_kernel,
            out_shape=jax.ShapeDtypeStruct((b_pad, NN_IN), jnp.float32),
            grid=grid,
            in_specs=[pl.BlockSpec((tb, XA_DIM), lambda i: (i, 0))]
                     + [const_spec(p) for p in fused_params],
            out_specs=pl.BlockSpec((tb, NN_IN), lambda i: (i, 0)),
            compiler_params=pltpu.CompilerParams(
                dimension_semantics=("parallel",),
                vmem_limit_bytes=48 * 1024 * 1024),
        )(xa, *fused_params)
        return jax.block_until_ready(out)

    try:
        out = run(use_buffered=hasattr(pl, "Buffered"))
    except Exception:  # fallback if Buffered(1) pipeline mode is unsupported
        out = run(use_buffered=False)
    return out[:B]


def drone2d_reference(x, act, params):
    """Pure-JAX reference using the ORIGINAL (un-fused) parameters."""
    (wf0, bf0, wf1, bf1, wf2, bf2, wfo, bfo,
     wg0, bg0, wg1, bg1, wg2, bg2, wgo, bgo) = params
    if x.ndim == 1:
        x = x[None, :]
    if act.ndim == 1:
        act = act[None, :]
    x_old = x
    x_f = x
    for w, b in ((wf0, bf0), (wf1, bf1), (wf2, bf2)):
        x_f = _leaky_relu(x_f @ w + b)
    x_f = x_f @ wfo + bfo
    x_g = x
    for w, b in ((wg0, bg0), (wg1, bg1), (wg2, bg2)):
        x_g = _leaky_relu(x_g @ w + b)
    x_g = x_g @ wgo + bgo
    bmm = jnp.einsum("bij,bj->bi", x_g.reshape(x_g.shape[0], 3, 2), act)
    xdot = x_f + bmm
    theta = x_old[:, 6:7]
    c, s = jnp.cos(DT * theta), jnp.sin(DT * theta)
    o01 = x_old[:, 0:2] + DT * x_old[:, 4:6]
    o2 = x_old[:, 2:3] * c + x_old[:, 3:4] * s
    o3 = x_old[:, 3:4] * c - x_old[:, 2:3] * s
    o456 = x_old[:, 4:7] + DT * xdot
    return jnp.concatenate([o01, o2, o3, o456], axis=-1)


if __name__ == "__main__":
    key = jax.random.PRNGKey(0)
    raw_params = init_params(jax.random.fold_in(key, 0))
    fused_bf16 = fuse_params(raw_params)                          # default path
    fused_f32 = fuse_params(raw_params, weight_dtype=jnp.float32)

    # Case 1: tiny real-time batch (single grid step).
    # Case 2: larger batch with a 5-step "parallel" grid + batch padding.
    # Case 3: batch that triggers the >=2-step (v7x megacore) split.
    for case_i, (B, blk) in enumerate(((2, 4096), (300, 64), (20, 4096))):
        kx, ka = jax.random.split(jax.random.fold_in(key, 100 + case_i))
        x = jax.random.normal(kx, (B, NN_IN), jnp.float32)
        act = jax.random.normal(ka, (B, ACT_DIM), jnp.float32)
        ref = drone2d_reference(x, act, raw_params)

        out = drone2d_forward(x, act, fused_bf16, block_b=blk)
        assert out.shape == (B, NN_IN)
        assert jnp.allclose(out, ref, atol=2e-2, rtol=2e-2), (
            float(jnp.max(jnp.abs(out - ref))))

        out32 = drone2d_forward(x, act, fused_f32, block_b=blk)
        assert jnp.allclose(out32, ref, atol=5e-3, rtol=5e-3), (
            float(jnp.max(jnp.abs(out32 - ref))))

    # 1-D (single state / single action) torch-style path.
    kx, ka = jax.random.split(jax.random.fold_in(key, 999))
    x1 = jax.random.normal(kx, (NN_IN,), jnp.float32)
    a1 = jax.random.normal(ka, (ACT_DIM,), jnp.float32)
    out1 = drone2d_forward(x1, a1, fused_bf16)
    ref1 = drone2d_reference(x1, a1, raw_params)
    assert out1.shape == (1, NN_IN)
    assert jnp.allclose(out1, ref1, atol=2e-2, rtol=2e-2)

    print("KERNEL_OK")
</pallas_src>

<mosaic_0001>
module attributes {stable_mosaic.version = 11 : i64} {
  func.func @drone2d_kernel(%arg0: i32, %arg1: memref<8x10xf32, #tpu.memory_space<vmem>>, %arg2: memref<7x128xbf16, #tpu.memory_space<vmem>>, %arg3: memref<1x128xf32, #tpu.memory_space<vmem>>, %arg4: memref<128x128xbf16, #tpu.memory_space<vmem>>, %arg5: memref<1x128xf32, #tpu.memory_space<vmem>>, %arg6: memref<128x128xbf16, #tpu.memory_space<vmem>>, %arg7: memref<1x128xf32, #tpu.memory_space<vmem>>, %arg8: memref<128x9xbf16, #tpu.memory_space<vmem>>, %arg9: memref<1x9xf32, #tpu.memory_space<vmem>>, %arg10: memref<3x9xf32, #tpu.memory_space<vmem>>, %arg11: memref<9x3xf32, #tpu.memory_space<vmem>>, %arg12: memref<8x7xf32, #tpu.memory_space<vmem>>) attributes {dimension_semantics = [#tpu.dimension_semantics<parallel>], iteration_bounds = array<i64: 1>, scalar_prefetch = 0 : i64, scratch_operands = 0 : i64, tpu.core_type = #tpu.core_type<tc>, window_params = [{transform_indices = @transform_0, window_bounds = array<i64: 8, 10>}, {pipeline_mode = #tpu.pipeline_mode<synchronous>, transform_indices = @transform_1, window_bounds = array<i64: 7, 128>}, {pipeline_mode = #tpu.pipeline_mode<synchronous>, transform_indices = @transform_2, window_bounds = array<i64: 1, 128>}, {pipeline_mode = #tpu.pipeline_mode<synchronous>, transform_indices = @transform_3, window_bounds = array<i64: 128, 128>}, {pipeline_mode = #tpu.pipeline_mode<synchronous>, transform_indices = @transform_4, window_bounds = array<i64: 1, 128>}, {pipeline_mode = #tpu.pipeline_mode<synchronous>, transform_indices = @transform_5, window_bounds = array<i64: 128, 128>}, {pipeline_mode = #tpu.pipeline_mode<synchronous>, transform_indices = @transform_6, window_bounds = array<i64: 1, 128>}, {pipeline_mode = #tpu.pipeline_mode<synchronous>, transform_indices = @transform_7, window_bounds = array<i64: 128, 9>}, {pipeline_mode = #tpu.pipeline_mode<synchronous>, transform_indices = @transform_8, window_bounds = array<i64: 1, 9>}, {pipeline_mode = #tpu.pipeline_mode<synchronous>, transform_indices = @transform_9, window_bounds = array<i64: 3, 9>}, {pipeline_mode = #tpu.pipeline_mode<synchronous>, transform_indices = @transform_10, window_bounds = array<i64: 9, 3>}, {transform_indices = @transform_11, window_bounds = array<i64: 8, 7>}]} {
    %c0 = arith.constant 0 : index
    %c0_0 = arith.constant 0 : index
    %0 = vector.load %arg1[%c0, %c0_0] : memref<8x10xf32, #tpu.memory_space<vmem>>, vector<8x10xf32>
    %1 = vector.extract_strided_slice %0 {offsets = [0, 0], sizes = [8, 7], strides = [1, 1]} : vector<8x10xf32> to vector<8x7xf32>
    %2 = vector.extract_strided_slice %0 {offsets = [0, 7], sizes = [8, 3], strides = [1, 1]} : vector<8x10xf32> to vector<8x3xf32>
    %c0_1 = arith.constant 0 : index
    %c0_2 = arith.constant 0 : index
    %3 = vector.load %arg2[%c0_1, %c0_2] : memref<7x128xbf16, #tpu.memory_space<vmem>>, vector<7x128xbf16>
    %4 = arith.truncf %1 : vector<8x7xf32> to vector<8x7xbf16>
    %cst = arith.constant dense<0.000000e+00> : vector<8x128xf32>
    %5 = tpu.matmul %4, %3, %cst {dimension_numbers = #tpu.dot_dimension_numbers<[1], [0], [0], [1], [0, 0, 1, 1], [], []>} : vector<8x7xbf16>, vector<7x128xbf16>, vector<8x128xf32> -> vector<8x128xf32>
    %c0_3 = arith.constant 0 : index
    %c0_4 = arith.constant 0 : index
    %6 = vector.load %arg3[%c0_3, %c0_4] : memref<1x128xf32, #tpu.memory_space<vmem>>, vector<1x128xf32>
    %7 = vector.broadcast %6 : vector<1x128xf32> to vector<8x128xf32>
    %8 = arith.addf %5, %7 : vector<8x128xf32>
    %cst_5 = arith.constant 0.00999999977 : f32
    %9 = vector.broadcast %cst_5 : f32 to vector<8x128xf32>
    %10 = arith.mulf %9, %8 : vector<8x128xf32>
    %11 = arith.maximumf %8, %10 : vector<8x128xf32>
    %c0_6 = arith.constant 0 : index
    %c0_7 = arith.constant 0 : index
    %12 = vector.load %arg4[%c0_6, %c0_7] : memref<128x128xbf16, #tpu.memory_space<vmem>>, vector<128x128xbf16>
    %13 = arith.truncf %11 : vector<8x128xf32> to vector<8x128xbf16>
    %cst_8 = arith.constant dense<0.000000e+00> : vector<8x128xf32>
    %14 = tpu.matmul %13, %12, %cst_8 {dimension_numbers = #tpu.dot_dimension_numbers<[1], [0], [0], [1], [0, 0, 1, 1], [], []>} : vector<8x128xbf16>, vector<128x128xbf16>, vector<8x128xf32> -> vector<8x128xf32>
    %c0_9 = arith.constant 0 : index
    %c0_10 = arith.constant 0 : index
    %15 = vector.load %arg5[%c0_9, %c0_10] : memref<1x128xf32, #tpu.memory_space<vmem>>, vector<1x128xf32>
    %16 = vector.broadcast %15 : vector<1x128xf32> to vector<8x128xf32>
    %17 = arith.addf %14, %16 : vector<8x128xf32>
    %cst_11 = arith.constant 0.00999999977 : f32
    %18 = vector.broadcast %cst_11 : f32 to vector<8x128xf32>
    %19 = arith.mulf %18, %17 : vector<8x128xf32>
    %20 = arith.maximumf %17, %19 : vector<8x128xf32>
    %c0_12 = arith.constant 0 : index
    %c0_13 = arith.constant 0 : index
    %21 = vector.load %arg6[%c0_12, %c0_13] : memref<128x128xbf16, #tpu.memory_space<vmem>>, vector<128x128xbf16>
    %22 = arith.truncf %20 : vector<8x128xf32> to vector<8x128xbf16>
    %cst_14 = arith.constant dense<0.000000e+00> : vector<8x128xf32>
    %23 = tpu.matmul %22, %21, %cst_14 {dimension_numbers = #tpu.dot_dimension_numbers<[1], [0], [0], [1], [0, 0, 1, 1], [], []>} : vector<8x128xbf16>, vector<128x128xbf16>, vector<8x128xf32> -> vector<8x128xf32>
    %c0_15 = arith.constant 0 : index
    %c0_16 = arith.constant 0 : index
    %24 = vector.load %arg7[%c0_15, %c0_16] : memref<1x128xf32, #tpu.memory_space<vmem>>, vector<1x128xf32>
    %25 = vector.broadcast %24 : vector<1x128xf32> to vector<8x128xf32>
    %26 = arith.addf %23, %25 : vector<8x128xf32>
    %cst_17 = arith.constant 0.00999999977 : f32
    %27 = vector.broadcast %cst_17 : f32 to vector<8x128xf32>
    %28 = arith.mulf %27, %26 : vector<8x128xf32>
    %29 = arith.maximumf %26, %28 : vector<8x128xf32>
    %c0_18 = arith.constant 0 : index
    %c0_19 = arith.constant 0 : index
    %30 = vector.load %arg8[%c0_18, %c0_19] : memref<128x9xbf16, #tpu.memory_space<vmem>>, vector<128x9xbf16>
    %31 = arith.truncf %29 : vector<8x128xf32> to vector<8x128xbf16>
    %cst_20 = arith.constant dense<0.000000e+00> : vector<8x9xf32>
    %32 = tpu.matmul %31, %30, %cst_20 {dimension_numbers = #tpu.dot_dimension_numbers<[1], [0], [0], [1], [0, 0, 1, 1], [], []>} : vector<8x128xbf16>, vector<128x9xbf16>, vector<8x9xf32> -> vector<8x9xf32>
    %c0_21 = arith.constant 0 : index
    %c0_22 = arith.constant 0 : index
    %33 = vector.load %arg9[%c0_21, %c0_22] : memref<1x9xf32, #tpu.memory_space<vmem>>, vector<1x9xf32>
    %34 = vector.broadcast %33 : vector<1x9xf32> to vector<8x9xf32>
    %35 = arith.addf %32, %34 : vector<8x9xf32>
    %c0_23 = arith.constant 0 : index
    %c0_24 = arith.constant 0 : index
    %36 = vector.load %arg10[%c0_23, %c0_24] : memref<3x9xf32, #tpu.memory_space<vmem>>, vector<3x9xf32>
    %cst_25 = arith.constant dense<0.000000e+00> : vector<8x9xf32>
    %37 = tpu.matmul %2, %36, %cst_25 {dimension_numbers = #tpu.dot_dimension_numbers<[1], [0], [0], [1], [0, 0, 1, 1], [], []>} : vector<8x3xf32>, vector<3x9xf32>, vector<8x9xf32> -> vector<8x9xf32>
    %38 = arith.mulf %35, %37 : vector<8x9xf32>
    %c0_26 = arith.constant 0 : index
    %c0_27 = arith.constant 0 : index
    %39 = vector.load %arg11[%c0_26, %c0_27] : memref<9x3xf32, #tpu.memory_space<vmem>>, vector<9x3xf32>
    %cst_28 = arith.constant dense<0.000000e+00> : vector<8x3xf32>
    %40 = tpu.matmul %38, %39, %cst_28 {dimension_numbers = #tpu.dot_dimension_numbers<[1], [0], [0], [1], [0, 0, 1, 1], [], []>} : vector<8x9xf32>, vector<9x3xf32>, vector<8x3xf32> -> vector<8x3xf32>
    %41 = vector.extract_strided_slice %1 {offsets = [0, 6], sizes = [8, 1], strides = [1, 1]} : vector<8x7xf32> to vector<8x1xf32>
    %cst_29 = arith.constant 2.000000e-02 : f32
    %42 = vector.broadcast %cst_29 : f32 to vector<8x1xf32>
    %43 = arith.mulf %42, %41 : vector<8x1xf32>
    %44 = math.cos %43 : vector<8x1xf32>
    %cst_30 = arith.constant 2.000000e-02 : f32
    %45 = vector.broadcast %cst_30 : f32 to vector<8x1xf32>
    %46 = arith.mulf %45, %41 : vector<8x1xf32>
    %47 = math.sin %46 : vector<8x1xf32>
    %48 = vector.extract_strided_slice %1 {offsets = [0, 0], sizes = [8, 2], strides = [1, 1]} : vector<8x7xf32> to vector<8x2xf32>
    %49 = vector.extract_strided_slice %1 {offsets = [0, 4], sizes = [8, 2], strides = [1, 1]} : vector<8x7xf32> to vector<8x2xf32>
    %cst_31 = arith.constant 2.000000e-02 : f32
    %50 = vector.broadcast %cst_31 : f32 to vector<8x2xf32>
    %51 = arith.mulf %50, %49 : vector<8x2xf32>
    %52 = arith.addf %48, %51 : vector<8x2xf32>
    %53 = vector.extract_strided_slice %1 {offsets = [0, 2], sizes = [8, 1], strides = [1, 1]} : vector<8x7xf32> to vector<8x1xf32>
    %54 = arith.mulf %53, %44 : vector<8x1xf32>
    %55 = vector.extract_strided_slice %1 {offsets = [0, 3], sizes = [8, 1], strides = [1, 1]} : vector<8x7xf32> to vector<8x1xf32>
    %56 = arith.mulf %55, %47 : vector<8x1xf32>
    %57 = arith.addf %54, %56 : vector<8x1xf32>
    %58 = vector.extract_strided_slice %1 {offsets = [0, 3], sizes = [8, 1], strides = [1, 1]} : vector<8x7xf32> to vector<8x1xf32>
    %59 = arith.mulf %58, %44 : vector<8x1xf32>
    %60 = vector.extract_strided_slice %1 {offsets = [0, 2], sizes = [8, 1], strides = [1, 1]} : vector<8x7xf32> to vector<8x1xf32>
    %61 = arith.mulf %60, %47 : vector<8x1xf32>
    %62 = arith.subf %59, %61 : vector<8x1xf32>
    %63 = vector.extract_strided_slice %1 {offsets = [0, 4], sizes = [8, 3], strides = [1, 1]} : vector<8x7xf32> to vector<8x3xf32>
    %cst_32 = arith.constant 2.000000e-02 : f32
    %64 = vector.broadcast %cst_32 : f32 to vector<8x3xf32>
    %65 = arith.mulf %64, %40 : vector<8x3xf32>
    %66 = arith.addf %63, %65 : vector<8x3xf32>
    %67 = tpu.concatenate %52, %57, %62, %66 in 1 : vector<8x2xf32>, vector<8x1xf32>, vector<8x1xf32>, vector<8x3xf32> -> vector<8x7xf32>
    %c0_33 = arith.constant 0 : index
    %c0_34 = arith.constant 0 : index
    %68 = vector.load %arg12[%c0_33, %c0_34] : memref<8x7xf32, #tpu.memory_space<vmem>>, vector<8x7xf32>
    tpu.vector_store %arg12[%c0_33, %c0_34], %67 {strides = array<i32>} : memref<8x7xf32, #tpu.memory_space<vmem>>, vector<8x7xf32>,
    return
  }
  func.func @transform_0(%arg0: i32) -> (i32, i32) {
    %c0_i32 = arith.constant 0 : i32
    %c0_i32_0 = arith.constant 0 : i32
    return %arg0, %c0_i32 : i32, i32
  }
  func.func @transform_1(%arg0: i32) -> (i32, i32) {
    %c0_i32 = arith.constant 0 : i32
    %c0_i32_0 = arith.constant 0 : i32
    %c0_i32_1 = arith.constant 0 : i32
    return %c0_i32, %c0_i32_0 : i32, i32
  }
  func.func @transform_2(%arg0: i32) -> (i32, i32) {
    %c0_i32 = arith.constant 0 : i32
    %c0_i32_0 = arith.constant 0 : i32
    %c0_i32_1 = arith.constant 0 : i32
    return %c0_i32, %c0_i32_0 : i32, i32
  }
  func.func @transform_3(%arg0: i32) -> (i32, i32) {
    %c0_i32 = arith.constant 0 : i32
    %c0_i32_0 = arith.constant 0 : i32
    %c0_i32_1 = arith.constant 0 : i32
    return %c0_i32, %c0_i32_0 : i32, i32
  }
  func.func @transform_4(%arg0: i32) -> (i32, i32) {
    %c0_i32 = arith.constant 0 : i32
    %c0_i32_0 = arith.constant 0 : i32
    %c0_i32_1 = arith.constant 0 : i32
    return %c0_i32, %c0_i32_0 : i32, i32
  }
  func.func @transform_5(%arg0: i32) -> (i32, i32) {
    %c0_i32 = arith.constant 0 : i32
    %c0_i32_0 = arith.constant 0 : i32
    %c0_i32_1 = arith.constant 0 : i32
    return %c0_i32, %c0_i32_0 : i32, i32
  }
  func.func @transform_6(%arg0: i32) -> (i32, i32) {
    %c0_i32 = arith.constant 0 : i32
    %c0_i32_0 = arith.constant 0 : i32
    %c0_i32_1 = arith.constant 0 : i32
    return %c0_i32, %c0_i32_0 : i32, i32
  }
  func.func @transform_7(%arg0: i32) -> (i32, i32) {
    %c0_i32 = arith.constant 0 : i32
    %c0_i32_0 = arith.constant 0 : i32
    %c0_i32_1 = arith.constant 0 : i32
    return %c0_i32, %c0_i32_0 : i32, i32
  }
  func.func @transform_8(%arg0: i32) -> (i32, i32) {
    %c0_i32 = arith.constant 0 : i32
    %c0_i32_0 = arith.constant 0 : i32
    %c0_i32_1 = arith.constant 0 : i32
    return %c0_i32, %c0_i32_0 : i32, i32
  }
  func.func @transform_9(%arg0: i32) -> (i32, i32) {
    %c0_i32 = arith.constant 0 : i32
    %c0_i32_0 = arith.constant 0 : i32
    %c0_i32_1 = arith.constant 0 : i32
    return %c0_i32, %c0_i32_0 : i32, i32
  }
  func.func @transform_10(%arg0: i32) -> (i32, i32) {
    %c0_i32 = arith.constant 0 : i32
    %c0_i32_0 = arith.constant 0 : i32
    %c0_i32_1 = arith.constant 0 : i32
    return %c0_i32, %c0_i32_0 : i32, i32
  }
  func.func @transform_11(%arg0: i32) -> (i32, i32) {
    %c0_i32 = arith.constant 0 : i32
    %c0_i32_0 = arith.constant 0 : i32
    return %arg0, %c0_i32 : i32, i32
  }
}

module attributes {stable_mosaic.version = 11 : i64} {
  func.func @drone2d_kernel(%arg0: i32, %arg1: memref<8x10xf32, #tpu.memory_space<vmem>>, %arg2: memref<7x128xbf16, #tpu.memory_space<vmem>>, %arg3: memref<1x128xf32, #tpu.memory_space<vmem>>, %arg4: memref<128x128xbf16, #tpu.memory_space<vmem>>, %arg5: memref<1x128xf32, #tpu.memory_space<vmem>>, %arg6: memref<128x128xbf16, #tpu.memory_space<vmem>>, %arg7: memref<1x128xf32, #tpu.memory_space<vmem>>, %arg8: memref<128x9xbf16, #tpu.memory_space<vmem>>, %arg9: memref<1x9xf32, #tpu.memory_space<vmem>>, %arg10: memref<3x9xf32, #tpu.memory_space<vmem>>, %arg11: memref<9x3xf32, #tpu.memory_space<vmem>>, %arg12: memref<8x7xf32, #tpu.memory_space<vmem>>) attributes {dimension_semantics = [#tpu.dimension_semantics<parallel>], iteration_bounds = array<i64: 1>, scalar_prefetch = 0 : i64, scratch_operands = 0 : i64, tpu.core_type = #tpu.core_type<tc>, window_params = [{transform_indices = @transform_0, window_bounds = array<i64: 8, 10>}, {pipeline_mode = #tpu.pipeline_mode<synchronous>, transform_indices = @transform_1, window_bounds = array<i64: 7, 128>}, {pipeline_mode = #tpu.pipeline_mode<synchronous>, transform_indices = @transform_2, window_bounds = array<i64: 1, 128>}, {pipeline_mode = #tpu.pipeline_mode<synchronous>, transform_indices = @transform_3, window_bounds = array<i64: 128, 128>}, {pipeline_mode = #tpu.pipeline_mode<synchronous>, transform_indices = @transform_4, window_bounds = array<i64: 1, 128>}, {pipeline_mode = #tpu.pipeline_mode<synchronous>, transform_indices = @transform_5, window_bounds = array<i64: 128, 128>}, {pipeline_mode = #tpu.pipeline_mode<synchronous>, transform_indices = @transform_6, window_bounds = array<i64: 1, 128>}, {pipeline_mode = #tpu.pipeline_mode<synchronous>, transform_indices = @transform_7, window_bounds = array<i64: 128, 9>}, {pipeline_mode = #tpu.pipeline_mode<synchronous>, transform_indices = @transform_8, window_bounds = array<i64: 1, 9>}, {pipeline_mode = #tpu.pipeline_mode<synchronous>, transform_indices = @transform_9, window_bounds = array<i64: 3, 9>}, {pipeline_mode = #tpu.pipeline_mode<synchronous>, transform_indices = @transform_10, window_bounds = array<i64: 9, 3>}, {transform_indices = @transform_11, window_bounds = array<i64: 8, 7>}]} {
    %c0 = arith.constant 0 : index
    %c0_0 = arith.constant 0 : index
    %0 = vector.load %arg1[%c0, %c0_0] : memref<8x10xf32, #tpu.memory_space<vmem>>, vector<8x10xf32>
    %1 = vector.extract_strided_slice %0 {offsets = [0, 0], sizes = [8, 7], strides = [1, 1]} : vector<8x10xf32> to vector<8x7xf32>
    %2 = vector.extract_strided_slice %0 {offsets = [0, 7], sizes = [8, 3], strides = [1, 1]} : vector<8x10xf32> to vector<8x3xf32>
    %c0_1 = arith.constant 0 : index
    %c0_2 = arith.constant 0 : index
    %3 = vector.load %arg2[%c0_1, %c0_2] : memref<7x128xbf16, #tpu.memory_space<vmem>>, vector<7x128xbf16>
    %4 = arith.truncf %1 : vector<8x7xf32> to vector<8x7xbf16>
    %cst = arith.constant dense<0.000000e+00> : vector<8x128xf32>
    %5 = tpu.matmul %4, %3, %cst {dimension_numbers = #tpu.dot_dimension_numbers<[1], [0], [0], [1], [0, 0, 1, 1], [], []>} : vector<8x7xbf16>, vector<7x128xbf16>, vector<8x128xf32> -> vector<8x128xf32>
    %c0_3 = arith.constant 0 : index
    %c0_4 = arith.constant 0 : index
    %6 = vector.load %arg3[%c0_3, %c0_4] : memref<1x128xf32, #tpu.memory_space<vmem>>, vector<1x128xf32>
    %7 = vector.broadcast %6 : vector<1x128xf32> to vector<8x128xf32>
    %8 = arith.addf %5, %7 : vector<8x128xf32>
    %cst_5 = arith.constant 0.00999999977 : f32
    %9 = vector.broadcast %cst_5 : f32 to vector<8x128xf32>
    %10 = arith.mulf %9, %8 : vector<8x128xf32>
    %11 = arith.maximumf %8, %10 : vector<8x128xf32>
    %c0_6 = arith.constant 0 : index
    %c0_7 = arith.constant 0 : index
    %12 = vector.load %arg4[%c0_6, %c0_7] : memref<128x128xbf16, #tpu.memory_space<vmem>>, vector<128x128xbf16>
    %13 = arith.truncf %11 : vector<8x128xf32> to vector<8x128xbf16>
    %cst_8 = arith.constant dense<0.000000e+00> : vector<8x128xf32>
    %14 = tpu.matmul %13, %12, %cst_8 {dimension_numbers = #tpu.dot_dimension_numbers<[1], [0], [0], [1], [0, 0, 1, 1], [], []>} : vector<8x128xbf16>, vector<128x128xbf16>, vector<8x128xf32> -> vector<8x128xf32>
    %c0_9 = arith.constant 0 : index
    %c0_10 = arith.constant 0 : index
    %15 = vector.load %arg5[%c0_9, %c0_10] : memref<1x128xf32, #tpu.memory_space<vmem>>, vector<1x128xf32>
    %16 = vector.broadcast %15 : vector<1x128xf32> to vector<8x128xf32>
    %17 = arith.addf %14, %16 : vector<8x128xf32>
    %cst_11 = arith.constant 0.00999999977 : f32
    %18 = vector.broadcast %cst_11 : f32 to vector<8x128xf32>
    %19 = arith.mulf %18, %17 : vector<8x128xf32>
    %20 = arith.maximumf %17, %19 : vector<8x128xf32>
    %c0_12 = arith.constant 0 : index
    %c0_13 = arith.constant 0 : index
    %21 = vector.load %arg6[%c0_12, %c0_13] : memref<128x128xbf16, #tpu.memory_space<vmem>>, vector<128x128xbf16>
    %22 = arith.truncf %20 : vector<8x128xf32> to vector<8x128xbf16>
    %cst_14 = arith.constant dense<0.000000e+00> : vector<8x128xf32>
    %23 = tpu.matmul %22, %21, %cst_14 {dimension_numbers = #tpu.dot_dimension_numbers<[1], [0], [0], [1], [0, 0, 1, 1], [], []>} : vector<8x128xbf16>, vector<128x128xbf16>, vector<8x128xf32> -> vector<8x128xf32>
    %c0_15 = arith.constant 0 : index
    %c0_16 = arith.constant 0 : index
    %24 = vector.load %arg7[%c0_15, %c0_16] : memref<1x128xf32, #tpu.memory_space<vmem>>, vector<1x128xf32>
    %25 = vector.broadcast %24 : vector<1x128xf32> to vector<8x128xf32>
    %26 = arith.addf %23, %25 : vector<8x128xf32>
    %cst_17 = arith.constant 0.00999999977 : f32
    %27 = vector.broadcast %cst_17 : f32 to vector<8x128xf32>
    %28 = arith.mulf %27, %26 : vector<8x128xf32>
    %29 = arith.maximumf %26, %28 : vector<8x128xf32>
    %c0_18 = arith.constant 0 : index
    %c0_19 = arith.constant 0 : index
    %30 = vector.load %arg8[%c0_18, %c0_19] : memref<128x9xbf16, #tpu.memory_space<vmem>>, vector<128x9xbf16>
    %31 = arith.truncf %29 : vector<8x128xf32> to vector<8x128xbf16>
    %cst_20 = arith.constant dense<0.000000e+00> : vector<8x9xf32>
    %32 = tpu.matmul %31, %30, %cst_20 {dimension_numbers = #tpu.dot_dimension_numbers<[1], [0], [0], [1], [0, 0, 1, 1], [], []>} : vector<8x128xbf16>, vector<128x9xbf16>, vector<8x9xf32> -> vector<8x9xf32>
    %c0_21 = arith.constant 0 : index
    %c0_22 = arith.constant 0 : index
    %33 = vector.load %arg9[%c0_21, %c0_22] : memref<1x9xf32, #tpu.memory_space<vmem>>, vector<1x9xf32>
    %34 = vector.broadcast %33 : vector<1x9xf32> to vector<8x9xf32>
    %35 = arith.addf %32, %34 : vector<8x9xf32>
    %c0_23 = arith.constant 0 : index
    %c0_24 = arith.constant 0 : index
    %36 = vector.load %arg10[%c0_23, %c0_24] : memref<3x9xf32, #tpu.memory_space<vmem>>, vector<3x9xf32>
    %cst_25 = arith.constant dense<0.000000e+00> : vector<8x9xf32>
    %37 = tpu.matmul %2, %36, %cst_25 {dimension_numbers = #tpu.dot_dimension_numbers<[1], [0], [0], [1], [0, 0, 1, 1], [], []>} : vector<8x3xf32>, vector<3x9xf32>, vector<8x9xf32> -> vector<8x9xf32>
    %38 = arith.mulf %35, %37 : vector<8x9xf32>
    %c0_26 = arith.constant 0 : index
    %c0_27 = arith.constant 0 : index
    %39 = vector.load %arg11[%c0_26, %c0_27] : memref<9x3xf32, #tpu.memory_space<vmem>>, vector<9x3xf32>
    %cst_28 = arith.constant dense<0.000000e+00> : vector<8x3xf32>
    %40 = tpu.matmul %38, %39, %cst_28 {dimension_numbers = #tpu.dot_dimension_numbers<[1], [0], [0], [1], [0, 0, 1, 1], [], []>} : vector<8x9xf32>, vector<9x3xf32>, vector<8x3xf32> -> vector<8x3xf32>
    %41 = vector.extract_strided_slice %1 {offsets = [0, 6], sizes = [8, 1], strides = [1, 1]} : vector<8x7xf32> to vector<8x1xf32>
    %cst_29 = arith.constant 2.000000e-02 : f32
    %42 = vector.broadcast %cst_29 : f32 to vector<8x1xf32>
    %43 = arith.mulf %42, %41 : vector<8x1xf32>
    %44 = math.cos %43 : vector<8x1xf32>
    %cst_30 = arith.constant 2.000000e-02 : f32
    %45 = vector.broadcast %cst_30 : f32 to vector<8x1xf32>
    %46 = arith.mulf %45, %41 : vector<8x1xf32>
    %47 = math.sin %46 : vector<8x1xf32>
    %48 = vector.extract_strided_slice %1 {offsets = [0, 0], sizes = [8, 2], strides = [1, 1]} : vector<8x7xf32> to vector<8x2xf32>
    %49 = vector.extract_strided_slice %1 {offsets = [0, 4], sizes = [8, 2], strides = [1, 1]} : vector<8x7xf32> to vector<8x2xf32>
    %cst_31 = arith.constant 2.000000e-02 : f32
    %50 = vector.broadcast %cst_31 : f32 to vector<8x2xf32>
    %51 = arith.mulf %50, %49 : vector<8x2xf32>
    %52 = arith.addf %48, %51 : vector<8x2xf32>
    %53 = vector.extract_strided_slice %1 {offsets = [0, 2], sizes = [8, 1], strides = [1, 1]} : vector<8x7xf32> to vector<8x1xf32>
    %54 = arith.mulf %53, %44 : vector<8x1xf32>
    %55 = vector.extract_strided_slice %1 {offsets = [0, 3], sizes = [8, 1], strides = [1, 1]} : vector<8x7xf32> to vector<8x1xf32>
    %56 = arith.mulf %55, %47 : vector<8x1xf32>
    %57 = arith.addf %54, %56 : vector<8x1xf32>
    %58 = vector.extract_strided_slice %1 {offsets = [0, 3], sizes = [8, 1], strides = [1, 1]} : vector<8x7xf32> to vector<8x1xf32>
    %59 = arith.mulf %58, %44 : vector<8x1xf32>
    %60 = vector.extract_strided_slice %1 {offsets = [0, 2], sizes = [8, 1], strides = [1, 1]} : vector<8x7xf32> to vector<8x1xf32>
    %61 = arith.mulf %60, %47 : vector<8x1xf32>
    %62 = arith.subf %59, %61 : vector<8x1xf32>
    %63 = vector.extract_strided_slice %1 {offsets = [0, 4], sizes = [8, 3], strides = [1, 1]} : vector<8x7xf32> to vector<8x3xf32>
    %cst_32 = arith.constant 2.000000e-02 : f32
    %64 = vector.broadcast %cst_32 : f32 to vector<8x3xf32>
    %65 = arith.mulf %64, %40 : vector<8x3xf32>
    %66 = arith.addf %63, %65 : vector<8x3xf32>
    %67 = tpu.concatenate %52, %57, %62, %66 in 1 : vector<8x2xf32>, vector<8x1xf32>, vector<8x1xf32>, vector<8x3xf32> -> vector<8x7xf32>
    %c0_33 = arith.constant 0 : index
    %c0_34 = arith.constant 0 : index
    %68 = vector.load %arg12[%c0_33, %c0_34] : memref<8x7xf32, #tpu.memory_space<vmem>>, vector<8x7xf32>
    tpu.vector_store %arg12[%c0_33, %c0_34], %67 {strides = array<i32>} : memref<8x7xf32, #tpu.memory_space<vmem>>, vector<8x7xf32>,
    return
  }
  func.func @transform_0(%arg0: i32) -> (i32, i32) {
    %c0_i32 = arith.constant 0 : i32
    %c0_i32_0 = arith.constant 0 : i32
    return %arg0, %c0_i32 : i32, i32
  }
  func.func @transform_1(%arg0: i32) -> (i32, i32) {
    %c0_i32 = arith.constant 0 : i32
    %c0_i32_0 = arith.constant 0 : i32
    %c0_i32_1 = arith.constant 0 : i32
    return %c0_i32, %c0_i32_0 : i32, i32
  }
  func.func @transform_2(%arg0: i32) -> (i32, i32) {
    %c0_i32 = arith.constant 0 : i32
    %c0_i32_0 = arith.constant 0 : i32
    %c0_i32_1 = arith.constant 0 : i32
    return %c0_i32, %c0_i32_0 : i32, i32
  }
  func.func @transform_3(%arg0: i32) -> (i32, i32) {
    %c0_i32 = arith.constant 0 : i32
    %c0_i32_0 = arith.constant 0 : i32
    %c0_i32_1 = arith.constant 0 : i32
    return %c0_i32, %c0_i32_0 : i32, i32
  }
  func.func @transform_4(%arg0: i32) -> (i32, i32) {
    %c0_i32 = arith.constant 0 : i32
    %c0_i32_0 = arith.constant 0 : i32
    %c0_i32_1 = arith.constant 0 : i32
    return %c0_i32, %c0_i32_0 : i32, i32
  }
  func.func @transform_5(%arg0: i32) -> (i32, i32) {
    %c0_i32 = arith.constant 0 : i32
    %c0_i32_0 = arith.constant 0 : i32
    %c0_i32_1 = arith.constant 0 : i32
    return %c0_i32, %c0_i32_0 : i32, i32
  }
  func.func @transform_6(%arg0: i32) -> (i32, i32) {
    %c0_i32 = arith.constant 0 : i32
    %c0_i32_0 = arith.constant 0 : i32
    %c0_i32_1 = arith.constant 0 : i32
    return %c0_i32, %c0_i32_0 : i32, i32
  }
  func.func @transform_7(%arg0: i32) -> (i32, i32) {
    %c0_i32 = arith.constant 0 : i32
    %c0_i32_0 = arith.constant 0 : i32
    %c0_i32_1 = arith.constant 0 : i32
    return %c0_i32, %c0_i32_0 : i32, i32
  }
  func.func @transform_8(%arg0: i32) -> (i32, i32) {
    %c0_i32 = arith.constant 0 : i32
    %c0_i32_0 = arith.constant 0 : i32
    %c0_i32_1 = arith.constant 0 : i32
    return %c0_i32, %c0_i32_0 : i32, i32
  }
  func.func @transform_9(%arg0: i32) -> (i32, i32) {
    %c0_i32 = arith.constant 0 : i32
    %c0_i32_0 = arith.constant 0 : i32
    %c0_i32_1 = arith.constant 0 : i32
    return %c0_i32, %c0_i32_0 : i32, i32
  }
  func.func @transform_10(%arg0: i32) -> (i32, i32) {
    %c0_i32 = arith.constant 0 : i32
    %c0_i32_0 = arith.constant 0 : i32
    %c0_i32_1 = arith.constant 0 : i32
    return %c0_i32, %c0_i32_0 : i32, i32
  }
  func.func @transform_11(%arg0: i32) -> (i32, i32) {
    %c0_i32 = arith.constant 0 : i32
    %c0_i32_0 = arith.constant 0 : i32
    return %arg0, %c0_i32 : i32, i32
  }
}

</mosaic_0001>

<llo_original>
// kernel: tpu_custom_call.1
$region0: #{tpu_custom_call.1}
  #allocation0 [shape = 'u32[]', space=smem, size = 0x4, offset = 0x4, fixed_abs, tag = 'smem constant byte address 0x4 - core index']
  #allocation1 [shape = 'u32[72,128]{1,0:T(1,128)}', space=vmem, size = 0x9000, scoped, tag = 'internal scratch']
  %s0 = inlined_call_operand.vmem [shape: f32[8,10], index: 0, kind: input, shape index: {}]
  %s1 = inlined_call_operand.vmem [shape: bf16[7,128], index: 1, kind: input, shape index: {}]
  %s2 = inlined_call_operand.vmem [shape: f32[1,128], index: 2, kind: input, shape index: {}]
  %s3 = inlined_call_operand.vmem [shape: bf16[128,128], index: 3, kind: input, shape index: {}]
  %s4 = inlined_call_operand.vmem [shape: f32[1,128], index: 4, kind: input, shape index: {}]
  %s5 = inlined_call_operand.hbm [shape: bf16[128,128], index: 5, kind: input, shape index: {}]
  %s6 = inlined_call_operand.vmem [shape: f32[1,128], index: 6, kind: input, shape index: {}]
  %s7 = inlined_call_operand.vmem [shape: bf16[128,9], index: 7, kind: input, shape index: {}]
  %s8 = inlined_call_operand.vmem [shape: f32[1,9], index: 8, kind: input, shape index: {}]
  %s9 = inlined_call_operand.vmem [shape: f32[3,9], index: 9, kind: input, shape index: {}]
  %s10 = inlined_call_operand.vmem [shape: f32[9,3], index: 10, kind: input, shape index: {}]
  %s11 = inlined_call_operand.hbm [shape: f32[8,7], index: 11, kind: output, shape index: {}]
  %s12 = sld [smem:[#allocation0]]
  $region58: #{tpu_custom_call.1} parent=0
    _
  %s14 = ssub.s32 1, %s12
  %s15 = scalar_select 0, %s14, %s12
  $region1: #{tpu_custom_call.1} parent=0
    #allocation2 [shape = 'u8[32768]{0}', space=vmem, size = 0x8000, scoped, tag = 'input window, operand 5, single buffered']
    #allocation3 [shape = 's32[1]{0}', space=sflag, size = 0x4, scoped, tag = 'scoped memory for tpu_custom_call.1']
    #allocation4 [shape = 's32[1]{0}', space=sflag, size = 0x4, scoped, tag = 'scoped memory for tpu_custom_call.1']
    #allocation5 [shape = 'u8[4096]{0}', space=vmem, size = 0x1000, scoped, tag = 'output window, operand 0, single buffered']
    %16 = vsyncpa [#allocation3], 0
    %17 = vsyncpa [#allocation4], 0
    // Predicated region
    $region2: #{tpu_custom_call.1} parent=1 // pred_check
      _
    $region3: #{tpu_custom_call.1} parent=1 // pred_check_branch
      %19 = sbr.rel (0) target = $region5
    $region4: #{tpu_custom_call.1} parent=1 // pred_region
      _
    $region5: #{tpu_custom_call.1} parent=1 // pred_fallthru
      _
    // Predicated region
    $region6: #{tpu_custom_call.1} parent=1 // pred_check
      _
    $region7: #{tpu_custom_call.1} parent=1 // pred_check_branch
      %21 = sbr.rel (0) target = $region9
    $region8: #{tpu_custom_call.1} parent=1 // pred_region
      _
    $region9: #{tpu_custom_call.1} parent=1 // pred_fallthru
      _
    // Predicated region
    $region10: #{tpu_custom_call.1} parent=1 // pred_check
      _
    $region11: #{tpu_custom_call.1} parent=1 // pred_check_branch
      %23 = sbr.rel (0) target = $region13
    $region12: #{tpu_custom_call.1} parent=1 // pred_region
      _
    $region13: #{tpu_custom_call.1} parent=1 // pred_fallthru
      _
    // Predicated region
    $region14: #{tpu_custom_call.1} parent=1 // pred_check
      _
    $region15: #{tpu_custom_call.1} parent=1 // pred_check_branch
      %25 = sbr.rel (0) target = $region17
    $region16: #{tpu_custom_call.1} parent=1 // pred_region
      _
    $region17: #{tpu_custom_call.1} parent=1 // pred_fallthru
      _
    // Predicated region
    $region18: #{tpu_custom_call.1} parent=1 // pred_check
      _
    $region19: #{tpu_custom_call.1} parent=1 // pred_check_branch
      %27 = sbr.rel (0) target = $region21
    $region20: #{tpu_custom_call.1} parent=1 // pred_region
      _
    $region21: #{tpu_custom_call.1} parent=1 // pred_fallthru
      _
    // Predicated region
    $region22: #{tpu_custom_call.1} parent=1 // pred_check
      _
    $region23: #{tpu_custom_call.1} parent=1 // pred_check_branch
      %29 = sbr.rel (0) target = $region25
    $region24: #{tpu_custom_call.1} parent=1 // pred_region
      %31 = vsyncadd [#allocation3], 0
      %s32 = sshll.u32 %s5, 4
      %s33 = int_to_ptr.hbm [resolvable:$true] %s32
      %s34 = sshll.u32 [#allocation2], 4
      %s35 = int_to_ptr.vmem [resolvable:$true] %s34
      %40 = dma.hbm_to_vmem [thread:$0]  %s33, 1024, %s35, [#allocation3], 64, 64, 4
    $region25: #{tpu_custom_call.1} parent=1 // pred_fallthru
      _
    // Predicated region
    $region26: #{tpu_custom_call.1} parent=1 // pred_check
      _
    $region27: #{tpu_custom_call.1} parent=1 // pred_check_branch
      %42 = sbr.rel (0) target = $region29
    $region28: #{tpu_custom_call.1} parent=1 // pred_region
      _
    $region29: #{tpu_custom_call.1} parent=1 // pred_fallthru
      _
    // Predicated region
    $region30: #{tpu_custom_call.1} parent=1 // pred_check
      _
    $region31: #{tpu_custom_call.1} parent=1 // pred_check_branch
      %44 = sbr.rel (0) target = $region33
    $region32: #{tpu_custom_call.1} parent=1 // pred_region
      _
    $region33: #{tpu_custom_call.1} parent=1 // pred_fallthru
      _
    // Predicated region
    $region34: #{tpu_custom_call.1} parent=1 // pred_check
      _
    $region35: #{tpu_custom_call.1} parent=1 // pred_check_branch
      %46 = sbr.rel (0) target = $region37
    $region36: #{tpu_custom_call.1} parent=1 // pred_region
      _
    $region37: #{tpu_custom_call.1} parent=1 // pred_fallthru
      _
    // Predicated region
    $region38: #{tpu_custom_call.1} parent=1 // pred_check
      _
    $region39: #{tpu_custom_call.1} parent=1 // pred_check_branch
      %48 = sbr.rel (0) target = $region41
    $region40: #{tpu_custom_call.1} parent=1 // pred_region
      _
    $region41: #{tpu_custom_call.1} parent=1 // pred_fallthru
      _
    // Predicated region
    $region42: #{tpu_custom_call.1} parent=1 // pred_check
      _
    $region43: #{tpu_custom_call.1} parent=1 // pred_check_branch
      %50 = sbr.rel (0) target = $region45
    $region44: #{tpu_custom_call.1} parent=1 // pred_region
      _
    $region45: #{tpu_custom_call.1} parent=1 // pred_fallthru
      _
    // Predicated region
    $region46: #{tpu_custom_call.1} parent=1 // pred_check
      _
    $region47: #{tpu_custom_call.1} parent=1 // pred_check_branch
      %52 = sbr.rel (0) target = $region49
    $region48: #{tpu_custom_call.1} parent=1 // pred_region
      %54 = dma.done [#allocation3], 1024
    $region49: #{tpu_custom_call.1} parent=1 // pred_fallthru
      _
    %v56 = vld [vmem:[%s0] sm:$0xff]
    %v57 = vld [vmem:[%s1] sm:$0xf]
    %v58 = vpack.c.bf16 %v56, %v56
    %v59 = vld [vmem:[%s2] sm:$0x1]
    %v61 = vperm.slane %v59, 0
    %vm63 = vcmask 56320
    %v65 = vsel %vm63, %v58, 0
    %vm67 = vcmask 1042432
    %vm68 = vcmask 1043456
    %v69 = vsel %vm67, 4294967295, 65535
    %v70 = vsel %vm68, %v69, 0
    %v72 = vand.u32 %v57, %v70
    %74 = vmatpush.bf16.msra.mxu0 0
    %75 = vmatpush.bf16.msra.mxu0 0
    %76 = vmatpush.bf16.msra.mxu0 0
    %77 = vmatpush.bf16.msra.mxu0 0
    %78 = vmatpush.bf16.msra.mxu0 0
    %79 = vmatpush.bf16.msra.mxu0 0
    %80 = vmatpush.bf16.msra.mxu0 0
    %81 = vmatpush.bf16.msra.mxu0 %v72
    %82 = vmatmul.bf16.gmra.mxu0 %v65
    %v83 = vpop.f32.mrf.mxu0
    %v84 = vadd.f32 %v61, %v83
    %v85 = vpop.f32.mrf.mxu0
    %86 = vdwg.mxu0
    %v87 = vmul.f32 %v84, 0.01
    %v88 = vmax.f32 %v84, %v87
    %v89 = vld [vmem:[%s3] sm:$0xf]
    %v90 = vld [vmem:[%s3 + $0x4] sm:$0xf]
    %v91 = vld [vmem:[%s3 + $0x8] sm:$0xf]
    %v92 = vld [vmem:[%s3 + $0xc] sm:$0xf]
    %v93 = vld [vmem:[%s3 + $0x10] sm:$0xf]
    %v94 = vld [vmem:[%s3 + $0x14] sm:$0xf]
    %v95 = vld [vmem:[%s3 + $0x18] sm:$0xf]
    %v96 = vld [vmem:[%s3 + $0x1c] sm:$0xf]
    %v97 = vld [vmem:[%s3 + $0x20] sm:$0xf]
    %v98 = vld [vmem:[%s3 + $0x24] sm:$0xf]
    %v99 = vld [vmem:[%s3 + $0x28] sm:$0xf]
    %v100 = vld [vmem:[%s3 + $0x2c] sm:$0xf]
    %v101 = vld [vmem:[%s3 + $0x30] sm:$0xf]
    %v102 = vld [vmem:[%s3 + $0x34] sm:$0xf]
    %v103 = vld [vmem:[%s3 + $0x38] sm:$0xf]
    %v104 = vld [vmem:[%s3 + $0x3c] sm:$0xf]
    %v105 = vpack.c.bf16 %v88, %v88
    %v106 = vld [vmem:[%s4] sm:$0x1]
    %v108 = vperm.slane %v106, 0
    %v126 = vunpack.c.l.b16 %v89
    %v127 = vunpack.c.l.b16 %v90
    %v128 = vunpack.c.l.b16 %v91
    %v129 = vunpack.c.l.b16 %v92
    %v130 = vunpack.c.l.b16 %v93
    %v131 = vunpack.c.l.b16 %v94
    %v132 = vunpack.c.l.b16 %v95
    %v133 = vunpack.c.l.b16 %v96
    %v134 = vunpack.c.l.b16 %v97
    %v135 = vunpack.c.l.b16 %v98
    %v136 = vunpack.c.l.b16 %v99
    %v137 = vunpack.c.l.b16 %v100
    %v138 = vunpack.c.l.b16 %v101
    %v139 = vunpack.c.l.b16 %v102
    %v140 = vunpack.c.l.b16 %v103
    %v141 = vunpack.c.l.b16 %v104
    %v142 = vpack.c.b16 %v127, %v126
    %v143 = vpack.c.b16 %v129, %v128
    %v144 = vpack.c.b16 %v131, %v130
    %v145 = vpack.c.b16 %v133, %v132
    %v146 = vpack.c.b16 %v135, %v134
    %v147 = vpack.c.b16 %v137, %v136
    %v148 = vpack.c.b16 %v139, %v138
    %v149 = vpack.c.b16 %v141, %v140
    %158 = vmatpush.bf16.msra.mxu0 %v149
    %159 = vmatpush.bf16.msra.mxu0 %v148
    %160 = vmatpush.bf16.msra.mxu0 %v147
    %161 = vmatpush.bf16.msra.mxu0 %v146
    %162 = vmatpush.bf16.msra.mxu0 %v145
    %163 = vmatpush.bf16.msra.mxu0 %v144
    %164 = vmatpush.bf16.msra.mxu0 %v143
    %165 = vmatpush.bf16.msra.mxu0 %v142
    %166 = vmatmul.bf16.gmra.mxu0 %v105
    %v167 = vpop.f32.mrf.mxu0
    %v168 = vadd.f32 %v108, %v167
    %v169 = vpop.f32.mrf.mxu0
    %170 = vdwg.mxu0
    %v171 = vmul.f32 %v168, 0.01
    %v172 = vmax.f32 %v168, %v171
    %v173 = vld [vmem:[#allocation2] sm:$0xf]
    %v174 = vld [vmem:[#allocation2 + $0x4] sm:$0xf]
    %v175 = vld [vmem:[#allocation2 + $0x8] sm:$0xf]
    %v176 = vld [vmem:[#allocation2 + $0xc] sm:$0xf]
    %v177 = vld [vmem:[#allocation2 + $0x10] sm:$0xf]
    %v178 = vld [vmem:[#allocation2 + $0x14] sm:$0xf]
    %v179 = vld [vmem:[#allocation2 + $0x18] sm:$0xf]
    %v180 = vld [vmem:[#allocation2 + $0x1c] sm:$0xf]
    %v181 = vld [vmem:[#allocation2 + $0x20] sm:$0xf]
    %v182 = vld [vmem:[#allocation2 + $0x24] sm:$0xf]
    %v183 = vld [vmem:[#allocation2 + $0x28] sm:$0xf]
    %v184 = vld [vmem:[#allocation2 + $0x2c] sm:$0xf]
    %v185 = vld [vmem:[#allocation2 + $0x30] sm:$0xf]
    %v186 = vld [vmem:[#allocation2 + $0x34] sm:$0xf]
    %v187 = vld [vmem:[#allocation2 + $0x38] sm:$0xf]
    %v188 = vld [vmem:[#allocation2 + $0x3c] sm:$0xf]
    %v189 = vpack.c.bf16 %v172, %v172
    %v190 = vld [vmem:[%s6] sm:$0x1]
    %v192 = vperm.slane %v190, 0
    %v210 = vunpack.c.l.b16 %v173
    %v211 = vunpack.c.l.b16 %v174
    %v212 = vunpack.c.l.b16 %v175
    %v213 = vunpack.c.l.b16 %v176
    %v214 = vunpack.c.l.b16 %v177
    %v215 = vunpack.c.l.b16 %v178
    %v216 = vunpack.c.l.b16 %v179
    %v217 = vunpack.c.l.b16 %v180
    %v218 = vunpack.c.l.b16 %v181
    %v219 = vunpack.c.l.b16 %v182
    %v220 = vunpack.c.l.b16 %v183
    %v221 = vunpack.c.l.b16 %v184
    %v222 = vunpack.c.l.b16 %v185
    %v223 = vunpack.c.l.b16 %v186
    %v224 = vunpack.c.l.b16 %v187
    %v225 = vunpack.c.l.b16 %v188
    %v226 = vpack.c.b16 %v211, %v210
    %v227 = vpack.c.b16 %v213, %v212
    %v228 = vpack.c.b16 %v215, %v214
    %v229 = vpack.c.b16 %v217, %v216
    %v230 = vpack.c.b16 %v219, %v218
    %v231 = vpack.c.b16 %v221, %v220
    %v232 = vpack.c.b16 %v223, %v222
    %v233 = vpack.c.b16 %v225, %v224
    %242 = vmatpush.bf16.msra.mxu0 %v233
    %243 = vmatpush.bf16.msra.mxu0 %v232
    %244 = vmatpush.bf16.msra.mxu0 %v231
    %245 = vmatpush.bf16.msra.mxu0 %v230
    %246 = vmatpush.bf16.msra.mxu0 %v229
    %247 = vmatpush.bf16.msra.mxu0 %v228
    %248 = vmatpush.bf16.msra.mxu0 %v227
    %249 = vmatpush.bf16.msra.mxu0 %v226
    %250 = vmatmul.bf16.gmra.mxu0 %v189
    %v251 = vpop.f32.mrf.mxu0
    %v252 = vadd.f32 %v192, %v251
    %v253 = vpop.f32.mrf.mxu0
    %254 = vdwg.mxu0
    %v255 = vmul.f32 %v252, 0.01
    %v256 = vmax.f32 %v252, %v255
    %v257 = vld [vmem:[%s7] sm:$0xf]
    %v258 = vld [vmem:[%s7 + $0x4] sm:$0xf]
    %v259 = vld [vmem:[%s7 + $0x8] sm:$0xf]
    %v260 = vld [vmem:[%s7 + $0xc] sm:$0xf]
    %v261 = vld [vmem:[%s7 + $0x10] sm:$0xf]
    %v262 = vld [vmem:[%s7 + $0x14] sm:$0xf]
    %v263 = vld [vmem:[%s7 + $0x18] sm:$0xf]
    %v264 = vld [vmem:[%s7 + $0x1c] sm:$0xf]
    %v265 = vld [vmem:[%s7 + $0x20] sm:$0xf]
    %v266 = vld [vmem:[%s7 + $0x24] sm:$0xf]
    %v267 = vld [vmem:[%s7 + $0x28] sm:$0xf]
    %v268 = vld [vmem:[%s7 + $0x2c] sm:$0xf]
    %v269 = vld [vmem:[%s7 + $0x30] sm:$0xf]
    %v270 = vld [vmem:[%s7 + $0x34] sm:$0xf]
    %v271 = vld [vmem:[%s7 + $0x38] sm:$0xf]
    %v272 = vld [vmem:[%s7 + $0x3c] sm:$0xf]
    %v273 = vpack.c.bf16 %v256, %v256
    %v274 = vld [vmem:[%s8] sm:$0x1]
    %v276 = vperm.slane %v274, 0
    %v294 = vunpack.c.l.b16 %v257
    %v295 = vunpack.c.l.b16 %v258
    %v296 = vunpack.c.l.b16 %v259
    %v297 = vunpack.c.l.b16 %v260
    %v298 = vunpack.c.l.b16 %v261
    %v299 = vunpack.c.l.b16 %v262
    %v300 = vunpack.c.l.b16 %v263
    %v301 = vunpack.c.l.b16 %v264
    %v302 = vunpack.c.l.b16 %v265
    %v303 = vunpack.c.l.b16 %v266
    %v304 = vunpack.c.l.b16 %v267
    %v305 = vunpack.c.l.b16 %v268
    %v306 = vunpack.c.l.b16 %v269
    %v307 = vunpack.c.l.b16 %v270
    %v308 = vunpack.c.l.b16 %v271
    %v309 = vunpack.c.l.b16 %v272
    %v310 = vpack.c.b16 %v295, %v294
    %v311 = vpack.c.b16 %v297, %v296
    %v312 = vpack.c.b16 %v299, %v298
    %v313 = vpack.c.b16 %v301, %v300
    %v314 = vpack.c.b16 %v303, %v302
    %v315 = vpack.c.b16 %v305, %v304
    %v316 = vpack.c.b16 %v307, %v306
    %v317 = vpack.c.b16 %v309, %v308
    %326 = vmatpush.bf16.msra.mxu0 %v317
    %327 = vmatpush.bf16.msra.mxu0 %v316
    %328 = vmatpush.bf16.msra.mxu0 %v315
    %329 = vmatpush.bf16.msra.mxu0 %v314
    %330 = vmatpush.bf16.msra.mxu0 %v313
    %331 = vmatpush.bf16.msra.mxu0 %v312
    %332 = vmatpush.bf16.msra.mxu0 %v311
    %333 = vmatpush.bf16.msra.mxu0 %v310
    %334 = vmatmul.bf16.gmra.mxu0 %v273
    %v335 = vpop.f32.mrf.mxu0
    %v336 = vadd.f32 %v276, %v335
    %v337 = vpop.f32.mrf.mxu0
    %338 = vdwg.mxu0
    %v339 = vld [vmem:[%s9] sm:$0x7]
    %341 = vrot.lane.b32.xlu0 %v56, 121
    %v342 = vpop.permute.xlu0 %341
    %vm343 = vcmask 23552
    %v344 = vsel %vm343, %v342, 0
    %v347 = vsel %vm67, %v339, 0
    %349 = vmatpush.msra.mxu0 0.0
    %350 = vmatpush.msra.mxu0 0.0
    %351 = vmatpush.msra.mxu0 0.0
    %352 = vmatpush.msra.mxu0 0.0
    %353 = vmatpush.msra.mxu0 0.0
    %354 = vmatpush.msra.mxu0 0.0
    %355 = vmatpush.msra.mxu0 0.0
    %356 = vmatpush.msra.mxu0 0.0
    %357 = vmatpush.msra.mxu0 0.0
    %358 = vmatpush.msra.mxu0 0.0
    %359 = vmatpush.msra.mxu0 0.0
    %360 = vmatpush.msra.mxu0 0.0
    %361 = vmatpush.msra.mxu0 0.0
    %362 = vmatpush.msra.mxu0 0.0
    %363 = vmatpush.msra.mxu0 0.0
    %364 = vmatpush.msra.mxu0 %v347
    %365 = vmatmul.f32.gmra.mxu0 %v344
    %v366 = vpop.f32.mrf.mxu0
    %v367 = vadd.f32 0.0, %v366
    %368 = vdwg.mxu0
    %v369 = vmul.f32 %v336, %v367
    %v370 = vld [vmem:[%s10] sm:$0xff]
    %v371 = vld [vmem:[%s10 + $0x8] sm:$0x1]
    %vm372 = vcmask 72704
    %v374 = vsel %vm372, %v369, 0
    %vm376 = vcmask 1040384
    %v378 = vsel %vm376, %v371, 0
    %380 = vmatpush.msra.mxu0 0.0
    %381 = vmatpush.msra.mxu0 0.0
    %382 = vmatpush.msra.mxu0 0.0
    %383 = vmatpush.msra.mxu0 0.0
    %384 = vmatpush.msra.mxu0 0.0
    %385 = vmatpush.msra.mxu0 0.0
    %386 = vmatpush.msra.mxu0 0.0
    %387 = vmatpush.msra.mxu0 0.0
    %388 = vmatpush.msra.mxu0 0.0
    %389 = vmatpush.msra.mxu0 0.0
    %390 = vmatpush.msra.mxu0 0.0
    %391 = vmatpush.msra.mxu0 0.0
    %392 = vmatpush.msra.mxu0 0.0
    %393 = vmatpush.msra.mxu0 0.0
    %394 = vmatpush.msra.mxu0 %v378
    %395 = vmatpush.msra.mxu0 %v370
    %396 = vmatmul.f32.gmra.mxu0 %v374
    %v397 = vpop.f32.mrf.mxu0
    %v398 = vadd.f32 0.0, %v397
    %399 = vdwg.mxu0
    %v400 = vmul.f32 %v56, 0.02
    %v401 = vand.u32 2147483647, %v400
    %vm402 = vcmp.le.f32.partialorder %v401, 0.7853982
    %vm403 = vcmp.lt.s32.totalorder %v400, 0
    %v404 = vand.u32 %v400, 2139095040
    %v405 = vshrl.u32 %v404, 23
    %v406 = vsub.s32 %v405, 127
    %v407 = vand.u32 2147483647, %v400
    %v408 = vand.u32 %v407, 8388607
    %v409 = vor.u32 %v408, 8388608
    %v410 = vsub.s32 0, %v409
    %v411 = vadd.s32 %v406, 1
    %vm412 = vcmp.gt.s32.totalorder %v411, 0
    %v413 = vsel %vm412, %v411, 0
    %v414 = vshrl.u32 %v413, 5
    %v415 = vand.u32 %v413, 31
    %v416 = vsub.s32 32, %v415
    %v417 = vshrl.u32 683565275, %v416
    %v418 = vshll.u32 683565275, %v415
    %v419 = vshrl.u32 2475754826, %v416
    %v420 = vor.u32 %v418, %v419
    %v421 = vshll.u32 2475754826, %v415
    %v422 = vshrl.u32 2131351028, %v416
    %v423 = vor.u32 %v421, %v422
    %v424 = vshll.u32 2131351028, %v415
    %v425 = vshrl.u32 2102212464, %v416
    %v426 = vor.u32 %v424, %v425
    %v427 = vshll.u32 2102212464, %v415
    %v428 = vshrl.u32 920167782, %v416
    %v429 = vor.u32 %v427, %v428
    %v430 = vshll.u32 920167782, %v415
    %v431 = vshrl.u32 1326507024, %v416
    %v432 = vor.u32 %v430, %v431
    %vm433 = vcmp.lt.s32.totalorder %v414, 1
    %vm434 = vcmp.lt.s32.totalorder %v414, 2
    %vm435 = vcmp.lt.s32.totalorder %v414, 3
    %vm436 = vcmp.lt.s32.totalorder %v414, 4
    %v437 = vsel %vm433, %v417, %v420
    %v438 = vsel %vm436, %v426, 2102212464
    %v439 = vsel %vm435, %v423, %v438
    %v440 = vsel %vm434, %v437, %v439
    %v441 = vsel %vm433, %v420, %v423
    %v442 = vsel %vm436, %v429, 920167782
    %v443 = vsel %vm435, %v426, %v442
    %v444 = vsel %vm434, %v441, %v443
    %v445 = vsel %vm433, %v423, %v426
    %v446 = vsel %vm436, %v432, 1326507024
    %v447 = vsel %vm435, %v429, %v446
    %v448 = vsel %vm434, %v445, %v447
    %v449 = vshll.u32 %v409, 8
    %v450 = vand.u32 %v449, 65535
    %v451 = vshrl.u32 %v449, 16
    %v452 = vand.u32 %v448, 65535
    %v453 = vshrl.u32 %v448, 16
    %v454 = vmul.u32 %v450, %v452
    %v455 = vmul.u32 %v450, %v453
    %v456 = vmul.u32 %v451, %v452
    %v457 = vmul.u32 %v451, %v453
    %v458 = vshll.u32 %v455, 16
    %v459 = vshrl.u32 %v455, 16
    %v460 = vshll.u32 %v456, 16
    %v461 = vshrl.u32 %v456, 16
    %vm462 = vc.u32 %v454, %v458
    %v463 = vsel %vm462, 1, 0
    %v464 = vadd.s32 %v454, %v458
    %v465 = vadd.s32 %v457, %v463
    %vm466 = vc.u32 %v464, %v460
    %v467 = vsel %vm466, 1, 0
    %v468 = vadd.s32 %v464, %v460
    %v469 = vadd.s32 %v465, %v467
    %v470 = vadd.s32 %v469, %v459
    %v471 = vadd.s32 %v470, %v461
    %v472 = vand.u32 %v449, 65535
    %v473 = vshrl.u32 %v449, 16
    %v474 = vand.u32 %v444, 65535
    %v475 = vshrl.u32 %v444, 16
    %v476 = vmul.u32 %v472, %v474
    %v477 = vmul.u32 %v472, %v475
    %v478 = vmul.u32 %v473, %v474
    %v479 = vmul.u32 %v473, %v475
    %v480 = vshll.u32 %v477, 16
    %v481 = vshrl.u32 %v477, 16
    %v482 = vshll.u32 %v478, 16
    %v483 = vshrl.u32 %v478, 16
    %vm484 = vc.u32 %v476, %v480
    %v485 = vsel %vm484, 1, 0
    %v486 = vadd.s32 %v476, %v480
    %v487 = vadd.s32 %v479, %v485
    %vm488 = vc.u32 %v486, %v482
    %v489 = vsel %vm488, 1, 0
    %v490 = vadd.s32 %v486, %v482
    %v491 = vadd.s32 %v487, %v489
    %v492 = vadd.s32 %v491, %v481
    %v493 = vadd.s32 %v492, %v483
    %v494 = vmul.u32 %v449, %v440
    %v495 = vadd.s32 %v471, %v490
    %vm496 = vc.u32 %v471, %v490
    %v497 = vadd.s32 %v493, 1
    %v498 = vsel %vm496, %v497, %v493
    %v499 = vadd.s32 %v494, %v498
    %v500 = vadd.s32 %v499, 536870912
    %v501 = vshrl.u32 %v500, 30
    %v502 = vshll.u32 %v501, 30
    %v503 = vsub.s32 %v499, %v502
    %vm504 = vcmp.lt.s32.totalorder %v503, 0
    %v505 = vsub.s32 0, %v503
    %v506 = vsel %vm504, %v505, %v503
    %v507 = vclz %v506
    %v508 = vsub.s32 %v507, 2
    %vm509 = vcmp.gt.s32.totalorder 0, %v508
    %v510 = vsel %vm509, 0, %v508
    %v511 = vsub.s32 32, %v510
    %v512 = vshll.u32 %v503, %v510
    %v513 = vshrl.u32 %v495, %v511
    %v514 = vor.u32 %v512, %v513
    %v515 = vsub.s32 4294967266, %v510
    %v516 = vadd.s32 %v515, 127
    %v517 = vshll.u32 %v516, 23
    %v518 = vor.u32 4788187, %v517
    %v519 = vand.u32 2147483647, %v518
    %v521 = vcvt.s32.f32 %v514
    %v522 = vmul.f32 %v521, %v519
    %v523 = vxor.u32 %v522, 2147483648
    %v524 = vsel %vm403, %v523, %v522
    %v525 = vsub.s32 4, %v501
    %v526 = vsel %vm403, %v525, %v501
    %v527 = vsel %vm402, %v400, %v524
    %v528 = vsel %vm402, 0, %v526
    %v529 = vmul.f32 %v527, %v527
    %v530 = vmul.f32 %v529, -0.001358992
    %v531 = vadd.f32 %v530, 0.041655596
    %v532 = vmul.f32 %v529, %v531
    %v533 = vadd.f32 %v532, -0.4999988
    %v534 = vmul.f32 %v529, %v533
    %v535 = vadd.f32 1.0, %v534
    %v536 = vmul.f32 %v527, %v527
    %v537 = vmul.f32 %v536, -0.00019511016
    %v538 = vadd.f32 %v537, 0.008332121
    %v539 = vmul.f32 %v536, %v538
    %v540 = vadd.f32 %v539, -0.16666654
    %v541 = vmul.f32 %v536, %v540
    %v542 = vadd.f32 %v541, 1.0
    %v543 = vmul.f32 %v542, %v527
    %vm544 = vweird.f32 %v400
    %v545 = vand.u32 %v528, 3
    %vm546 = vcmp.lt.s32.totalorder %v545, 2
    %vm547 = vcmp.eq.s32.totalorder %v545, 0
    %v548 = vxor.u32 %v543, 2147483648
    %v549 = vsel %vm547, %v535, %v548
    %vm550 = vcmp.eq.s32.totalorder %v545, 2
    %v551 = vxor.u32 %v535, 2147483648
    %v552 = vsel %vm550, %v551, %v543
    %v553 = vsel %vm546, %v549, %v552
    %v554 = vsel %vm544, nan, %v553
    %v555 = vand.u32 2147483647, %v400
    %vm556 = vcmp.le.f32.partialorder %v555, 0.7853982
    %vm557 = vcmp.lt.s32.totalorder %v400, 0
    %v558 = vand.u32 %v400, 2139095040
    %v559 = vshrl.u32 %v558, 23
    %v560 = vsub.s32 %v559, 127
    %v561 = vand.u32 2147483647, %v400
    %v562 = vand.u32 %v561, 8388607
    %v563 = vor.u32 %v562, 8388608
    %v564 = vsub.s32 0, %v563
    %v565 = vadd.s32 %v560, 1
    %vm566 = vcmp.gt.s32.totalorder %v565, 0
    %v567 = vsel %vm566, %v565, 0
    %v568 = vshrl.u32 %v567, 5
    %v569 = vand.u32 %v567, 31
    %v570 = vsub.s32 32, %v569
    %v571 = vshrl.u32 683565275, %v570
    %v572 = vshll.u32 683565275, %v569
    %v573 = vshrl.u32 2475754826, %v570
    %v574 = vor.u32 %v572, %v573
    %v575 = vshll.u32 2475754826, %v569
    %v576 = vshrl.u32 2131351028, %v570
    %v577 = vor.u32 %v575, %v576
    %v578 = vshll.u32 2131351028, %v569
    %v579 = vshrl.u32 2102212464, %v570
    %v580 = vor.u32 %v578, %v579
    %v581 = vshll.u32 2102212464, %v569
    %v582 = vshrl.u32 920167782, %v570
    %v583 = vor.u32 %v581, %v582
    %v584 = vshll.u32 920167782, %v569
    %v585 = vshrl.u32 1326507024, %v570
    %v586 = vor.u32 %v584, %v585
    %vm587 = vcmp.lt.s32.totalorder %v568, 1
    %vm588 = vcmp.lt.s32.totalorder %v568, 2
    %vm589 = vcmp.lt.s32.totalorder %v568, 3
    %vm590 = vcmp.lt.s32.totalorder %v568, 4
    %v591 = vsel %vm587, %v571, %v574
    %v592 = vsel %vm590, %v580, 2102212464
    %v593 = vsel %vm589, %v577, %v592
    %v594 = vsel %vm588, %v591, %v593
    %v595 = vsel %vm587, %v574, %v577
    %v596 = vsel %vm590, %v583, 920167782
    %v597 = vsel %vm589, %v580, %v596
    %v598 = vsel %vm588, %v595, %v597
    %v599 = vsel %vm587, %v577, %v580
    %v600 = vsel %vm590, %v586, 1326507024
    %v601 = vsel %vm589, %v583, %v600
    %v602 = vsel %vm588, %v599, %v601
    %v603 = vshll.u32 %v563, 8
    %v604 = vand.u32 %v603, 65535
    %v605 = vshrl.u32 %v603, 16
    %v606 = vand.u32 %v602, 65535
    %v607 = vshrl.u32 %v602, 16
    %v608 = vmul.u32 %v604, %v606
    %v609 = vmul.u32 %v604, %v607
    %v610 = vmul.u32 %v605, %v606
    %v611 = vmul.u32 %v605, %v607
    %v612 = vshll.u32 %v609, 16
    %v613 = vshrl.u32 %v609, 16
    %v614 = vshll.u32 %v610, 16
    %v615 = vshrl.u32 %v610, 16
    %vm616 = vc.u32 %v608, %v612
    %v617 = vsel %vm616, 1, 0
    %v618 = vadd.s32 %v608, %v612
    %v619 = vadd.s32 %v611, %v617
    %vm620 = vc.u32 %v618, %v614
    %v621 = vsel %vm620, 1, 0
    %v622 = vadd.s32 %v618, %v614
    %v623 = vadd.s32 %v619, %v621
    %v624 = vadd.s32 %v623, %v613
    %v625 = vadd.s32 %v624, %v615
    %v626 = vand.u32 %v603, 65535
    %v627 = vshrl.u32 %v603, 16
    %v628 = vand.u32 %v598, 65535
    %v629 = vshrl.u32 %v598, 16
    %v630 = vmul.u32 %v626, %v628
    %v631 = vmul.u32 %v626, %v629
    %v632 = vmul.u32 %v627, %v628
    %v633 = vmul.u32 %v627, %v629
    %v634 = vshll.u32 %v631, 16
    %v635 = vshrl.u32 %v631, 16
    %v636 = vshll.u32 %v632, 16
    %v637 = vshrl.u32 %v632, 16
    %vm638 = vc.u32 %v630, %v634
    %v639 = vsel %vm638, 1, 0
    %v640 = vadd.s32 %v630, %v634
    %v641 = vadd.s32 %v633, %v639
    %vm642 = vc.u32 %v640, %v636
    %v643 = vsel %vm642, 1, 0
    %v644 = vadd.s32 %v640, %v636
    %v645 = vadd.s32 %v641, %v643
    %v646 = vadd.s32 %v645, %v635
    %v647 = vadd.s32 %v646, %v637
    %v648 = vmul.u32 %v603, %v594
    %v649 = vadd.s32 %v625, %v644
    %vm650 = vc.u32 %v625, %v644
    %v651 = vadd.s32 %v647, 1
    %v652 = vsel %vm650, %v651, %v647
    %v653 = vadd.s32 %v648, %v652
    %v654 = vadd.s32 %v653, 536870912
    %v655 = vshrl.u32 %v654, 30
    %v656 = vshll.u32 %v655, 30
    %v657 = vsub.s32 %v653, %v656
    %vm658 = vcmp.lt.s32.totalorder %v657, 0
    %v659 = vsub.s32 0, %v657
    %v660 = vsel %vm658, %v659, %v657
    %v661 = vclz %v660
    %v662 = vsub.s32 %v661, 2
    %vm663 = vcmp.gt.s32.totalorder 0, %v662
    %v664 = vsel %vm663, 0, %v662
    %v665 = vsub.s32 32, %v664
    %v666 = vshll.u32 %v657, %v664
    %v667 = vshrl.u32 %v649, %v665
    %v668 = vor.u32 %v666, %v667
    %v669 = vsub.s32 4294967266, %v664
    %v670 = vadd.s32 %v669, 127
    %v671 = vshll.u32 %v670, 23
    %v672 = vor.u32 4788187, %v671
    %v673 = vand.u32 2147483647, %v672
    %v675 = vcvt.s32.f32 %v668
    %v676 = vmul.f32 %v675, %v673
    %v677 = vxor.u32 %v676, 2147483648
    %v678 = vsel %vm557, %v677, %v676
    %v679 = vsub.s32 4, %v655
    %v680 = vsel %vm557, %v679, %v655
    %v681 = vsel %vm556, %v400, %v678
    %v682 = vsel %vm556, 0, %v680
    %v683 = vmul.f32 %v681, %v681
    %v684 = vmul.f32 %v683, -0.001358992
    %v685 = vadd.f32 %v684, 0.041655596
    %v686 = vmul.f32 %v683, %v685
    %v687 = vadd.f32 %v686, -0.4999988
    %v688 = vmul.f32 %v683, %v687
    %v689 = vadd.f32 1.0, %v688
    %v690 = vmul.f32 %v681, %v681
    %v691 = vmul.f32 %v690, -0.00019511016
    %v692 = vadd.f32 %v691, 0.008332121
    %v693 = vmul.f32 %v690, %v692
    %v694 = vadd.f32 %v693, -0.16666654
    %v695 = vmul.f32 %v690, %v694
    %v696 = vadd.f32 %v695, 1.0
    %v697 = vmul.f32 %v696, %v681
    %vm698 = vweird.f32 %v400
    %v699 = vadd.s32 %v682, 3
    %v700 = vand.u32 %v699, 3
    %vm701 = vcmp.lt.s32.totalorder %v700, 2
    %vm702 = vcmp.eq.s32.totalorder %v700, 0
    %v703 = vxor.u32 %v697, 2147483648
    %v704 = vsel %vm702, %v689, %v703
    %vm705 = vcmp.eq.s32.totalorder %v700, 2
    %v706 = vxor.u32 %v689, 2147483648
    %v707 = vsel %vm705, %v706, %v697
    %v708 = vsel %vm701, %v704, %v707
    %v709 = vsel %vm698, nan, %v708
    %711 = vrot.lane.b32.xlu0 %v400, 124
    %v712 = vpop.permute.xlu0 %711
    %v714 = vadd.f32 %v56, %v712
    %716 = vrot.lane.b32.xlu0 %v554, 124
    %v717 = vpop.permute.xlu0 %716
    %v719 = vmul.f32 %v56, %v717
    %721 = vrot.lane.b32.xlu0 %v709, 125
    %v722 = vpop.permute.xlu0 %721
    %v724 = vmul.f32 %v56, %v722
    %726 = vrot.lane.b32.xlu0 %v724, 127
    %v727 = vpop.permute.xlu0 %726
    %v729 = vadd.f32 %v719, %v727
    %730 = vrot.lane.b32.xlu0 %v554, 125
    %v731 = vpop.permute.xlu0 %730
    %v733 = vmul.f32 %v56, %v731
    %734 = vrot.lane.b32.xlu0 %v709, 124
    %v735 = vpop.permute.xlu0 %734
    %v737 = vmul.f32 %v56, %v735
    %739 = vrot.lane.b32.xlu0 %v737, 1
    %v740 = vpop.permute.xlu0 %739
    %v742 = vsub.f32 %v733, %v740
    %v743 = vmul.f32 %v398, 0.02
    %745 = vrot.lane.b32.xlu0 %v743, 4
    %v746 = vpop.permute.xlu0 %745
    %v748 = vadd.f32 %v56, %v746
    %vm749 = vcmask 15360
    %v750 = vsel %vm749, %v714, %v729
    %v751 = vsel %vm343, %v750, %v742
    %vm752 = vcmask 31744
    %v753 = vsel %vm752, %v751, %v748
    %754 = vst.msk [vmem:[#allocation5] sm:$0xff] %vm63, %v753
    // Predicated region
    $region50: #{tpu_custom_call.1} parent=1 // pred_check
      _
    $region51: #{tpu_custom_call.1} parent=1 // pred_check_branch
      %756 = sbr.rel (0) target = $region53
    $region52: #{tpu_custom_call.1} parent=1 // pred_region
      %758 = vsyncadd [#allocation4], 0
      %s760 = sshll.u32 [#allocation5], 4
      %s761 = int_to_ptr.vmem [resolvable:$true] %s760
      %s762 = sshll.u32 %s11, 4
      %s763 = int_to_ptr.hbm [resolvable:$true] %s762
      %765 = dma.vmem_to_hbm [thread:$0]  %s761, 128, %s763, [#allocation4]
    $region53: #{tpu_custom_call.1} parent=1 // pred_fallthru
      _
    // Predicated region
    $region54: #{tpu_custom_call.1} parent=1 // pred_check
      _
    $region55: #{tpu_custom_call.1} parent=1 // pred_check_branch
      %767 = sbr.rel (0) target = $region57
    $region56: #{tpu_custom_call.1} parent=1 // pred_region
      %769 = dma.done [#allocation4], 128
    $region57: #{tpu_custom_call.1} parent=1 // pred_fallthru
      _
    %770 = vsyncpa [#allocation3], 1
    %771 = vsyncpa [#allocation4], 1

// kernel: tpu_custom_call.1
$region0: #{tpu_custom_call.1}
  #allocation0 [shape = 'u32[]', space=smem, size = 0x4, offset = 0x4, fixed_abs, tag = 'smem constant byte address 0x4 - core index']
  #allocation1 [shape = 'u32[72,128]{1,0:T(1,128)}', space=vmem, size = 0x9000, scoped, tag = 'internal scratch']
  %s0 = inlined_call_operand.vmem [shape: f32[8,10], index: 0, kind: input, shape index: {}]
  %s1 = inlined_call_operand.vmem [shape: bf16[7,128], index: 1, kind: input, shape index: {}]
  %s2 = inlined_call_operand.vmem [shape: f32[1,128], index: 2, kind: input, shape index: {}]
  %s3 = inlined_call_operand.vmem [shape: bf16[128,128], index: 3, kind: input, shape index: {}]
  %s4 = inlined_call_operand.vmem [shape: f32[1,128], index: 4, kind: input, shape index: {}]
  %s5 = inlined_call_operand.hbm [shape: bf16[128,128], index: 5, kind: input, shape index: {}]
  %s6 = inlined_call_operand.vmem [shape: f32[1,128], index: 6, kind: input, shape index: {}]
  %s7 = inlined_call_operand.vmem [shape: bf16[128,9], index: 7, kind: input, shape index: {}]
  %s8 = inlined_call_operand.vmem [shape: f32[1,9], index: 8, kind: input, shape index: {}]
  %s9 = inlined_call_operand.vmem [shape: f32[3,9], index: 9, kind: input, shape index: {}]
  %s10 = inlined_call_operand.vmem [shape: f32[9,3], index: 10, kind: input, shape index: {}]
  %s11 = inlined_call_operand.hbm [shape: f32[8,7], index: 11, kind: output, shape index: {}]
  %s12 = sld [smem:[#allocation0]]
  $region58: #{tpu_custom_call.1} parent=0
    _
  %s14 = ssub.s32 1, %s12
  %s15 = scalar_select 0, %s14, %s12
  $region1: #{tpu_custom_call.1} parent=0
    #allocation2 [shape = 'u8[32768]{0}', space=vmem, size = 0x8000, scoped, tag = 'input window, operand 5, single buffered']
    #allocation3 [shape = 's32[1]{0}', space=sflag, size = 0x4, scoped, tag = 'scoped memory for tpu_custom_call.1']
    #allocation4 [shape = 's32[1]{0}', space=sflag, size = 0x4, scoped, tag = 'scoped memory for tpu_custom_call.1']
    #allocation5 [shape = 'u8[4096]{0}', space=vmem, size = 0x1000, scoped, tag = 'output window, operand 0, single buffered']
    %16 = vsyncpa [#allocation3], 0
    %17 = vsyncpa [#allocation4], 0
    // Predicated region
    $region2: #{tpu_custom_call.1} parent=1 // pred_check
      _
    $region3: #{tpu_custom_call.1} parent=1 // pred_check_branch
      %19 = sbr.rel (0) target = $region5
    $region4: #{tpu_custom_call.1} parent=1 // pred_region
      _
    $region5: #{tpu_custom_call.1} parent=1 // pred_fallthru
      _
    // Predicated region
    $region6: #{tpu_custom_call.1} parent=1 // pred_check
      _
    $region7: #{tpu_custom_call.1} parent=1 // pred_check_branch
      %21 = sbr.rel (0) target = $region9
    $region8: #{tpu_custom_call.1} parent=1 // pred_region
      _
    $region9: #{tpu_custom_call.1} parent=1 // pred_fallthru
      _
    // Predicated region
    $region10: #{tpu_custom_call.1} parent=1 // pred_check
      _
    $region11: #{tpu_custom_call.1} parent=1 // pred_check_branch
      %23 = sbr.rel (0) target = $region13
    $region12: #{tpu_custom_call.1} parent=1 // pred_region
      _
    $region13: #{tpu_custom_call.1} parent=1 // pred_fallthru
      _
    // Predicated region
    $region14: #{tpu_custom_call.1} parent=1 // pred_check
      _
    $region15: #{tpu_custom_call.1} parent=1 // pred_check_branch
      %25 = sbr.rel (0) target = $region17
    $region16: #{tpu_custom_call.1} parent=1 // pred_region
      _
    $region17: #{tpu_custom_call.1} parent=1 // pred_fallthru
      _
    // Predicated region
    $region18: #{tpu_custom_call.1} parent=1 // pred_check
      _
    $region19: #{tpu_custom_call.1} parent=1 // pred_check_branch
      %27 = sbr.rel (0) target = $region21
    $region20: #{tpu_custom_call.1} parent=1 // pred_region
      _
    $region21: #{tpu_custom_call.1} parent=1 // pred_fallthru
      _
    // Predicated region
    $region22: #{tpu_custom_call.1} parent=1 // pred_check
      _
    $region23: #{tpu_custom_call.1} parent=1 // pred_check_branch
      %29 = sbr.rel (0) target = $region25
    $region24: #{tpu_custom_call.1} parent=1 // pred_region
      %31 = vsyncadd [#allocation3], 0
      %s32 = sshll.u32 %s5, 4
      %s33 = int_to_ptr.hbm [resolvable:$true] %s32
      %s34 = sshll.u32 [#allocation2], 4
      %s35 = int_to_ptr.vmem [resolvable:$true] %s34
      %40 = dma.hbm_to_vmem [thread:$0]  %s33, 1024, %s35, [#allocation3], 64, 64, 4
    $region25: #{tpu_custom_call.1} parent=1 // pred_fallthru
      _
    // Predicated region
    $region26: #{tpu_custom_call.1} parent=1 // pred_check
      _
    $region27: #{tpu_custom_call.1} parent=1 // pred_check_branch
      %42 = sbr.rel (0) target = $region29
    $region28: #{tpu_custom_call.1} parent=1 // pred_region
      _
    $region29: #{tpu_custom_call.1} parent=1 // pred_fallthru
      _
    // Predicated region
    $region30: #{tpu_custom_call.1} parent=1 // pred_check
      _
    $region31: #{tpu_custom_call.1} parent=1 // pred_check_branch
      %44 = sbr.rel (0) target = $region33
    $region32: #{tpu_custom_call.1} parent=1 // pred_region
      _
    $region33: #{tpu_custom_call.1} parent=1 // pred_fallthru
      _
    // Predicated region
    $region34: #{tpu_custom_call.1} parent=1 // pred_check
      _
    $region35: #{tpu_custom_call.1} parent=1 // pred_check_branch
      %46 = sbr.rel (0) target = $region37
    $region36: #{tpu_custom_call.1} parent=1 // pred_region
      _
    $region37: #{tpu_custom_call.1} parent=1 // pred_fallthru
      _
    // Predicated region
    $region38: #{tpu_custom_call.1} parent=1 // pred_check
      _
    $region39: #{tpu_custom_call.1} parent=1 // pred_check_branch
      %48 = sbr.rel (0) target = $region41
    $region40: #{tpu_custom_call.1} parent=1 // pred_region
      _
    $region41: #{tpu_custom_call.1} parent=1 // pred_fallthru
      _
    // Predicated region
    $region42: #{tpu_custom_call.1} parent=1 // pred_check
      _
    $region43: #{tpu_custom_call.1} parent=1 // pred_check_branch
      %50 = sbr.rel (0) target = $region45
    $region44: #{tpu_custom_call.1} parent=1 // pred_region
      _
    $region45: #{tpu_custom_call.1} parent=1 // pred_fallthru
      _
    // Predicated region
    $region46: #{tpu_custom_call.1} parent=1 // pred_check
      _
    $region47: #{tpu_custom_call.1} parent=1 // pred_check_branch
      %52 = sbr.rel (0) target = $region49
    $region48: #{tpu_custom_call.1} parent=1 // pred_region
      %54 = dma.done [#allocation3], 1024
    $region49: #{tpu_custom_call.1} parent=1 // pred_fallthru
      _
    %v56 = vld [vmem:[%s0] sm:$0xff]
    %v57 = vld [vmem:[%s1] sm:$0xf]
    %v58 = vpack.c.bf16 %v56, %v56
    %v59 = vld [vmem:[%s2] sm:$0x1]
    %v61 = vperm.slane %v59, 0
    %vm63 = vcmask 56320
    %v65 = vsel %vm63, %v58, 0
    %vm67 = vcmask 1042432
    %vm68 = vcmask 1043456
    %v69 = vsel %vm67, 4294967295, 65535
    %v70 = vsel %vm68, %v69, 0
    %v72 = vand.u32 %v57, %v70
    %74 = vmatpush.bf16.msra.mxu0 0
    %75 = vmatpush.bf16.msra.mxu0 0
    %76 = vmatpush.bf16.msra.mxu0 0
    %77 = vmatpush.bf16.msra.mxu0 0
    %78 = vmatpush.bf16.msra.mxu0 0
    %79 = vmatpush.bf16.msra.mxu0 0
    %80 = vmatpush.bf16.msra.mxu0 0
    %81 = vmatpush.bf16.msra.mxu0 %v72
    %82 = vmatmul.bf16.gmra.mxu0 %v65
    %v83 = vpop.f32.mrf.mxu0
    %v84 = vadd.f32 %v61, %v83
    %v85 = vpop.f32.mrf.mxu0
    %86 = vdwg.mxu0
    %v87 = vmul.f32 %v84, 0.01
    %v88 = vmax.f32 %v84, %v87
    %v89 = vld [vmem:[%s3] sm:$0xf]
    %v90 = vld [vmem:[%s3 + $0x4] sm:$0xf]
    %v91 = vld [vmem:[%s3 + $0x8] sm:$0xf]
    %v92 = vld [vmem:[%s3 + $0xc] sm:$0xf]
    %v93 = vld [vmem:[%s3 + $0x10] sm:$0xf]
    %v94 = vld [vmem:[%s3 + $0x14] sm:$0xf]
    %v95 = vld [vmem:[%s3 + $0x18] sm:$0xf]
    %v96 = vld [vmem:[%s3 + $0x1c] sm:$0xf]
    %v97 = vld [vmem:[%s3 + $0x20] sm:$0xf]
    %v98 = vld [vmem:[%s3 + $0x24] sm:$0xf]
    %v99 = vld [vmem:[%s3 + $0x28] sm:$0xf]
    %v100 = vld [vmem:[%s3 + $0x2c] sm:$0xf]
    %v101 = vld [vmem:[%s3 + $0x30] sm:$0xf]
    %v102 = vld [vmem:[%s3 + $0x34] sm:$0xf]
    %v103 = vld [vmem:[%s3 + $0x38] sm:$0xf]
    %v104 = vld [vmem:[%s3 + $0x3c] sm:$0xf]
    %v105 = vpack.c.bf16 %v88, %v88
    %v106 = vld [vmem:[%s4] sm:$0x1]
    %v108 = vperm.slane %v106, 0
    %v126 = vunpack.c.l.b16 %v89
    %v127 = vunpack.c.l.b16 %v90
    %v128 = vunpack.c.l.b16 %v91
    %v129 = vunpack.c.l.b16 %v92
    %v130 = vunpack.c.l.b16 %v93
    %v131 = vunpack.c.l.b16 %v94
    %v132 = vunpack.c.l.b16 %v95
    %v133 = vunpack.c.l.b16 %v96
    %v134 = vunpack.c.l.b16 %v97
    %v135 = vunpack.c.l.b16 %v98
    %v136 = vunpack.c.l.b16 %v99
    %v137 = vunpack.c.l.b16 %v100
    %v138 = vunpack.c.l.b16 %v101
    %v139 = vunpack.c.l.b16 %v102
    %v140 = vunpack.c.l.b16 %v103
    %v141 = vunpack.c.l.b16 %v104
    %v142 = vpack.c.b16 %v127, %v126
    %v143 = vpack.c.b16 %v129, %v128
    %v144 = vpack.c.b16 %v131, %v130
    %v145 = vpack.c.b16 %v133, %v132
    %v146 = vpack.c.b16 %v135, %v134
    %v147 = vpack.c.b16 %v137, %v136
    %v148 = vpack.c.b16 %v139, %v138
    %v149 = vpack.c.b16 %v141, %v140
    %158 = vmatpush.bf16.msra.mxu0 %v149
    %159 = vmatpush.bf16.msra.mxu0 %v148
    %160 = vmatpush.bf16.msra.mxu0 %v147
    %161 = vmatpush.bf16.msra.mxu0 %v146
    %162 = vmatpush.bf16.msra.mxu0 %v145
    %163 = vmatpush.bf16.msra.mxu0 %v144
    %164 = vmatpush.bf16.msra.mxu0 %v143
    %165 = vmatpush.bf16.msra.mxu0 %v142
    %166 = vmatmul.bf16.gmra.mxu0 %v105
    %v167 = vpop.f32.mrf.mxu0
    %v168 = vadd.f32 %v108, %v167
    %v169 = vpop.f32.mrf.mxu0
    %170 = vdwg.mxu0
    %v171 = vmul.f32 %v168, 0.01
    %v172 = vmax.f32 %v168, %v171
    %v173 = vld [vmem:[#allocation2] sm:$0xf]
    %v174 = vld [vmem:[#allocation2 + $0x4] sm:$0xf]
    %v175 = vld [vmem:[#allocation2 + $0x8] sm:$0xf]
    %v176 = vld [vmem:[#allocation2 + $0xc] sm:$0xf]
    %v177 = vld [vmem:[#allocation2 + $0x10] sm:$0xf]
    %v178 = vld [vmem:[#allocation2 + $0x14] sm:$0xf]
    %v179 = vld [vmem:[#allocation2 + $0x18] sm:$0xf]
    %v180 = vld [vmem:[#allocation2 + $0x1c] sm:$0xf]
    %v181 = vld [vmem:[#allocation2 + $0x20] sm:$0xf]
    %v182 = vld [vmem:[#allocation2 + $0x24] sm:$0xf]
    %v183 = vld [vmem:[#allocation2 + $0x28] sm:$0xf]
    %v184 = vld [vmem:[#allocation2 + $0x2c] sm:$0xf]
    %v185 = vld [vmem:[#allocation2 + $0x30] sm:$0xf]
    %v186 = vld [vmem:[#allocation2 + $0x34] sm:$0xf]
    %v187 = vld [vmem:[#allocation2 + $0x38] sm:$0xf]
    %v188 = vld [vmem:[#allocation2 + $0x3c] sm:$0xf]
    %v189 = vpack.c.bf16 %v172, %v172
    %v190 = vld [vmem:[%s6] sm:$0x1]
    %v192 = vperm.slane %v190, 0
    %v210 = vunpack.c.l.b16 %v173
    %v211 = vunpack.c.l.b16 %v174
    %v212 = vunpack.c.l.b16 %v175
    %v213 = vunpack.c.l.b16 %v176
    %v214 = vunpack.c.l.b16 %v177
    %v215 = vunpack.c.l.b16 %v178
    %v216 = vunpack.c.l.b16 %v179
    %v217 = vunpack.c.l.b16 %v180
    %v218 = vunpack.c.l.b16 %v181
    %v219 = vunpack.c.l.b16 %v182
    %v220 = vunpack.c.l.b16 %v183
    %v221 = vunpack.c.l.b16 %v184
    %v222 = vunpack.c.l.b16 %v185
    %v223 = vunpack.c.l.b16 %v186
    %v224 = vunpack.c.l.b16 %v187
    %v225 = vunpack.c.l.b16 %v188
    %v226 = vpack.c.b16 %v211, %v210
    %v227 = vpack.c.b16 %v213, %v212
    %v228 = vpack.c.b16 %v215, %v214
    %v229 = vpack.c.b16 %v217, %v216
    %v230 = vpack.c.b16 %v219, %v218
    %v231 = vpack.c.b16 %v221, %v220
    %v232 = vpack.c.b16 %v223, %v222
    %v233 = vpack.c.b16 %v225, %v224
    %242 = vmatpush.bf16.msra.mxu0 %v233
    %243 = vmatpush.bf16.msra.mxu0 %v232
    %244 = vmatpush.bf16.msra.mxu0 %v231
    %245 = vmatpush.bf16.msra.mxu0 %v230
    %246 = vmatpush.bf16.msra.mxu0 %v229
    %247 = vmatpush.bf16.msra.mxu0 %v228
    %248 = vmatpush.bf16.msra.mxu0 %v227
    %249 = vmatpush.bf16.msra.mxu0 %v226
    %250 = vmatmul.bf16.gmra.mxu0 %v189
    %v251 = vpop.f32.mrf.mxu0
    %v252 = vadd.f32 %v192, %v251
    %v253 = vpop.f32.mrf.mxu0
    %254 = vdwg.mxu0
    %v255 = vmul.f32 %v252, 0.01
    %v256 = vmax.f32 %v252, %v255
    %v257 = vld [vmem:[%s7] sm:$0xf]
    %v258 = vld [vmem:[%s7 + $0x4] sm:$0xf]
    %v259 = vld [vmem:[%s7 + $0x8] sm:$0xf]
    %v260 = vld [vmem:[%s7 + $0xc] sm:$0xf]
    %v261 = vld [vmem:[%s7 + $0x10] sm:$0xf]
    %v262 = vld [vmem:[%s7 + $0x14] sm:$0xf]
    %v263 = vld [vmem:[%s7 + $0x18] sm:$0xf]
    %v264 = vld [vmem:[%s7 + $0x1c] sm:$0xf]
    %v265 = vld [vmem:[%s7 + $0x20] sm:$0xf]
    %v266 = vld [vmem:[%s7 + $0x24] sm:$0xf]
    %v267 = vld [vmem:[%s7 + $0x28] sm:$0xf]
    %v268 = vld [vmem:[%s7 + $0x2c] sm:$0xf]
    %v269 = vld [vmem:[%s7 + $0x30] sm:$0xf]
    %v270 = vld [vmem:[%s7 + $0x34] sm:$0xf]
    %v271 = vld [vmem:[%s7 + $0x38] sm:$0xf]
    %v272 = vld [vmem:[%s7 + $0x3c] sm:$0xf]
    %v273 = vpack.c.bf16 %v256, %v256
    %v274 = vld [vmem:[%s8] sm:$0x1]
    %v276 = vperm.slane %v274, 0
    %v294 = vunpack.c.l.b16 %v257
    %v295 = vunpack.c.l.b16 %v258
    %v296 = vunpack.c.l.b16 %v259
    %v297 = vunpack.c.l.b16 %v260
    %v298 = vunpack.c.l.b16 %v261
    %v299 = vunpack.c.l.b16 %v262
    %v300 = vunpack.c.l.b16 %v263
    %v301 = vunpack.c.l.b16 %v264
    %v302 = vunpack.c.l.b16 %v265
    %v303 = vunpack.c.l.b16 %v266
    %v304 = vunpack.c.l.b16 %v267
    %v305 = vunpack.c.l.b16 %v268
    %v306 = vunpack.c.l.b16 %v269
    %v307 = vunpack.c.l.b16 %v270
    %v308 = vunpack.c.l.b16 %v271
    %v309 = vunpack.c.l.b16 %v272
    %v310 = vpack.c.b16 %v295, %v294
    %v311 = vpack.c.b16 %v297, %v296
    %v312 = vpack.c.b16 %v299, %v298
    %v313 = vpack.c.b16 %v301, %v300
    %v314 = vpack.c.b16 %v303, %v302
    %v315 = vpack.c.b16 %v305, %v304
    %v316 = vpack.c.b16 %v307, %v306
    %v317 = vpack.c.b16 %v309, %v308
    %326 = vmatpush.bf16.msra.mxu0 %v317
    %327 = vmatpush.bf16.msra.mxu0 %v316
    %328 = vmatpush.bf16.msra.mxu0 %v315
    %329 = vmatpush.bf16.msra.mxu0 %v314
    %330 = vmatpush.bf16.msra.mxu0 %v313
    %331 = vmatpush.bf16.msra.mxu0 %v312
    %332 = vmatpush.bf16.msra.mxu0 %v311
    %333 = vmatpush.bf16.msra.mxu0 %v310
    %334 = vmatmul.bf16.gmra.mxu0 %v273
    %v335 = vpop.f32.mrf.mxu0
    %v336 = vadd.f32 %v276, %v335
    %v337 = vpop.f32.mrf.mxu0
    %338 = vdwg.mxu0
    %v339 = vld [vmem:[%s9] sm:$0x7]
    %341 = vrot.lane.b32.xlu0 %v56, 121
    %v342 = vpop.permute.xlu0 %341
    %vm343 = vcmask 23552
    %v344 = vsel %vm343, %v342, 0
    %v347 = vsel %vm67, %v339, 0
    %349 = vmatpush.msra.mxu0 0.0
    %350 = vmatpush.msra.mxu0 0.0
    %351 = vmatpush.msra.mxu0 0.0
    %352 = vmatpush.msra.mxu0 0.0
    %353 = vmatpush.msra.mxu0 0.0
    %354 = vmatpush.msra.mxu0 0.0
    %355 = vmatpush.msra.mxu0 0.0
    %356 = vmatpush.msra.mxu0 0.0
    %357 = vmatpush.msra.mxu0 0.0
    %358 = vmatpush.msra.mxu0 0.0
    %359 = vmatpush.msra.mxu0 0.0
    %360 = vmatpush.msra.mxu0 0.0
    %361 = vmatpush.msra.mxu0 0.0
    %362 = vmatpush.msra.mxu0 0.0
    %363 = vmatpush.msra.mxu0 0.0
    %364 = vmatpush.msra.mxu0 %v347
    %365 = vmatmul.f32.gmra.mxu0 %v344
    %v366 = vpop.f32.mrf.mxu0
    %v367 = vadd.f32 0.0, %v366
    %368 = vdwg.mxu0
    %v369 = vmul.f32 %v336, %v367
    %v370 = vld [vmem:[%s10] sm:$0xff]
    %v371 = vld [vmem:[%s10 + $0x8] sm:$0x1]
    %vm372 = vcmask 72704
    %v374 = vsel %vm372, %v369, 0
    %vm376 = vcmask 1040384
    %v378 = vsel %vm376, %v371, 0
    %380 = vmatpush.msra.mxu0 0.0
    %381 = vmatpush.msra.mxu0 0.0
    %382 = vmatpush.msra.mxu0 0.0
    %383 = vmatpush.msra.mxu0 0.0
    %384 = vmatpush.msra.mxu0 0.0
    %385 = vmatpush.msra.mxu0 0.0
    %386 = vmatpush.msra.mxu0 0.0
    %387 = vmatpush.msra.mxu0 0.0
    %388 = vmatpush.msra.mxu0 0.0
    %389 = vmatpush.msra.mxu0 0.0
    %390 = vmatpush.msra.mxu0 0.0
    %391 = vmatpush.msra.mxu0 0.0
    %392 = vmatpush.msra.mxu0 0.0
    %393 = vmatpush.msra.mxu0 0.0
    %394 = vmatpush.msra.mxu0 %v378
    %395 = vmatpush.msra.mxu0 %v370
    %396 = vmatmul.f32.gmra.mxu0 %v374
    %v397 = vpop.f32.mrf.mxu0
    %v398 = vadd.f32 0.0, %v397
    %399 = vdwg.mxu0
    %v400 = vmul.f32 %v56, 0.02
    %v401 = vand.u32 2147483647, %v400
    %vm402 = vcmp.le.f32.partialorder %v401, 0.7853982
    %vm403 = vcmp.lt.s32.totalorder %v400, 0
    %v404 = vand.u32 %v400, 2139095040
    %v405 = vshrl.u32 %v404, 23
    %v406 = vsub.s32 %v405, 127
    %v407 = vand.u32 2147483647, %v400
    %v408 = vand.u32 %v407, 8388607
    %v409 = vor.u32 %v408, 8388608
    %v410 = vsub.s32 0, %v409
    %v411 = vadd.s32 %v406, 1
    %vm412 = vcmp.gt.s32.totalorder %v411, 0
    %v413 = vsel %vm412, %v411, 0
    %v414 = vshrl.u32 %v413, 5
    %v415 = vand.u32 %v413, 31
    %v416 = vsub.s32 32, %v415
    %v417 = vshrl.u32 683565275, %v416
    %v418 = vshll.u32 683565275, %v415
    %v419 = vshrl.u32 2475754826, %v416
    %v420 = vor.u32 %v418, %v419
    %v421 = vshll.u32 2475754826, %v415
    %v422 = vshrl.u32 2131351028, %v416
    %v423 = vor.u32 %v421, %v422
    %v424 = vshll.u32 2131351028, %v415
    %v425 = vshrl.u32 2102212464, %v416
    %v426 = vor.u32 %v424, %v425
    %v427 = vshll.u32 2102212464, %v415
    %v428 = vshrl.u32 920167782, %v416
    %v429 = vor.u32 %v427, %v428
    %v430 = vshll.u32 920167782, %v415
    %v431 = vshrl.u32 1326507024, %v416
    %v432 = vor.u32 %v430, %v431
    %vm433 = vcmp.lt.s32.totalorder %v414, 1
    %vm434 = vcmp.lt.s32.totalorder %v414, 2
    %vm435 = vcmp.lt.s32.totalorder %v414, 3
    %vm436 = vcmp.lt.s32.totalorder %v414, 4
    %v437 = vsel %vm433, %v417, %v420
    %v438 = vsel %vm436, %v426, 2102212464
    %v439 = vsel %vm435, %v423, %v438
    %v440 = vsel %vm434, %v437, %v439
    %v441 = vsel %vm433, %v420, %v423
    %v442 = vsel %vm436, %v429, 920167782
    %v443 = vsel %vm435, %v426, %v442
    %v444 = vsel %vm434, %v441, %v443
    %v445 = vsel %vm433, %v423, %v426
    %v446 = vsel %vm436, %v432, 1326507024
    %v447 = vsel %vm435, %v429, %v446
    %v448 = vsel %vm434, %v445, %v447
    %v449 = vshll.u32 %v409, 8
    %v450 = vand.u32 %v449, 65535
    %v451 = vshrl.u32 %v449, 16
    %v452 = vand.u32 %v448, 65535
    %v453 = vshrl.u32 %v448, 16
    %v454 = vmul.u32 %v450, %v452
    %v455 = vmul.u32 %v450, %v453
    %v456 = vmul.u32 %v451, %v452
    %v457 = vmul.u32 %v451, %v453
    %v458 = vshll.u32 %v455, 16
    %v459 = vshrl.u32 %v455, 16
    %v460 = vshll.u32 %v456, 16
    %v461 = vshrl.u32 %v456, 16
    %vm462 = vc.u32 %v454, %v458
    %v463 = vsel %vm462, 1, 0
    %v464 = vadd.s32 %v454, %v458
    %v465 = vadd.s32 %v457, %v463
    %vm466 = vc.u32 %v464, %v460
    %v467 = vsel %vm466, 1, 0
    %v468 = vadd.s32 %v464, %v460
    %v469 = vadd.s32 %v465, %v467
    %v470 = vadd.s32 %v469, %v459
    %v471 = vadd.s32 %v470, %v461
    %v472 = vand.u32 %v449, 65535
    %v473 = vshrl.u32 %v449, 16
    %v474 = vand.u32 %v444, 65535
    %v475 = vshrl.u32 %v444, 16
    %v476 = vmul.u32 %v472, %v474
    %v477 = vmul.u32 %v472, %v475
    %v478 = vmul.u32 %v473, %v474
    %v479 = vmul.u32 %v473, %v475
    %v480 = vshll.u32 %v477, 16
    %v481 = vshrl.u32 %v477, 16
    %v482 = vshll.u32 %v478, 16
    %v483 = vshrl.u32 %v478, 16
    %vm484 = vc.u32 %v476, %v480
    %v485 = vsel %vm484, 1, 0
    %v486 = vadd.s32 %v476, %v480
    %v487 = vadd.s32 %v479, %v485
    %vm488 = vc.u32 %v486, %v482
    %v489 = vsel %vm488, 1, 0
    %v490 = vadd.s32 %v486, %v482
    %v491 = vadd.s32 %v487, %v489
    %v492 = vadd.s32 %v491, %v481
    %v493 = vadd.s32 %v492, %v483
    %v494 = vmul.u32 %v449, %v440
    %v495 = vadd.s32 %v471, %v490
    %vm496 = vc.u32 %v471, %v490
    %v497 = vadd.s32 %v493, 1
    %v498 = vsel %vm496, %v497, %v493
    %v499 = vadd.s32 %v494, %v498
    %v500 = vadd.s32 %v499, 536870912
    %v501 = vshrl.u32 %v500, 30
    %v502 = vshll.u32 %v501, 30
    %v503 = vsub.s32 %v499, %v502
    %vm504 = vcmp.lt.s32.totalorder %v503, 0
    %v505 = vsub.s32 0, %v503
    %v506 = vsel %vm504, %v505, %v503
    %v507 = vclz %v506
    %v508 = vsub.s32 %v507, 2
    %vm509 = vcmp.gt.s32.totalorder 0, %v508
    %v510 = vsel %vm509, 0, %v508
    %v511 = vsub.s32 32, %v510
    %v512 = vshll.u32 %v503, %v510
    %v513 = vshrl.u32 %v495, %v511
    %v514 = vor.u32 %v512, %v513
    %v515 = vsub.s32 4294967266, %v510
    %v516 = vadd.s32 %v515, 127
    %v517 = vshll.u32 %v516, 23
    %v518 = vor.u32 4788187, %v517
    %v519 = vand.u32 2147483647, %v518
    %v521 = vcvt.s32.f32 %v514
    %v522 = vmul.f32 %v521, %v519
    %v523 = vxor.u32 %v522, 2147483648
    %v524 = vsel %vm403, %v523, %v522
    %v525 = vsub.s32 4, %v501
    %v526 = vsel %vm403, %v525, %v501
    %v527 = vsel %vm402, %v400, %v524
    %v528 = vsel %vm402, 0, %v526
    %v529 = vmul.f32 %v527, %v527
    %v530 = vmul.f32 %v529, -0.001358992
    %v531 = vadd.f32 %v530, 0.041655596
    %v532 = vmul.f32 %v529, %v531
    %v533 = vadd.f32 %v532, -0.4999988
    %v534 = vmul.f32 %v529, %v533
    %v535 = vadd.f32 1.0, %v534
    %v536 = vmul.f32 %v527, %v527
    %v537 = vmul.f32 %v536, -0.00019511016
    %v538 = vadd.f32 %v537, 0.008332121
    %v539 = vmul.f32 %v536, %v538
    %v540 = vadd.f32 %v539, -0.16666654
    %v541 = vmul.f32 %v536, %v540
    %v542 = vadd.f32 %v541, 1.0
    %v543 = vmul.f32 %v542, %v527
    %vm544 = vweird.f32 %v400
    %v545 = vand.u32 %v528, 3
    %vm546 = vcmp.lt.s32.totalorder %v545, 2
    %vm547 = vcmp.eq.s32.totalorder %v545, 0
    %v548 = vxor.u32 %v543, 2147483648
    %v549 = vsel %vm547, %v535, %v548
    %vm550 = vcmp.eq.s32.totalorder %v545, 2
    %v551 = vxor.u32 %v535, 2147483648
    %v552 = vsel %vm550, %v551, %v543
    %v553 = vsel %vm546, %v549, %v552
    %v554 = vsel %vm544, nan, %v553
    %v555 = vand.u32 2147483647, %v400
    %vm556 = vcmp.le.f32.partialorder %v555, 0.7853982
    %vm557 = vcmp.lt.s32.totalorder %v400, 0
    %v558 = vand.u32 %v400, 2139095040
    %v559 = vshrl.u32 %v558, 23
    %v560 = vsub.s32 %v559, 127
    %v561 = vand.u32 2147483647, %v400
    %v562 = vand.u32 %v561, 8388607
    %v563 = vor.u32 %v562, 8388608
    %v564 = vsub.s32 0, %v563
    %v565 = vadd.s32 %v560, 1
    %vm566 = vcmp.gt.s32.totalorder %v565, 0
    %v567 = vsel %vm566, %v565, 0
    %v568 = vshrl.u32 %v567, 5
    %v569 = vand.u32 %v567, 31
    %v570 = vsub.s32 32, %v569
    %v571 = vshrl.u32 683565275, %v570
    %v572 = vshll.u32 683565275, %v569
    %v573 = vshrl.u32 2475754826, %v570
    %v574 = vor.u32 %v572, %v573
    %v575 = vshll.u32 2475754826, %v569
    %v576 = vshrl.u32 2131351028, %v570
    %v577 = vor.u32 %v575, %v576
    %v578 = vshll.u32 2131351028, %v569
    %v579 = vshrl.u32 2102212464, %v570
    %v580 = vor.u32 %v578, %v579
    %v581 = vshll.u32 2102212464, %v569
    %v582 = vshrl.u32 920167782, %v570
    %v583 = vor.u32 %v581, %v582
    %v584 = vshll.u32 920167782, %v569
    %v585 = vshrl.u32 1326507024, %v570
    %v586 = vor.u32 %v584, %v585
    %vm587 = vcmp.lt.s32.totalorder %v568, 1
    %vm588 = vcmp.lt.s32.totalorder %v568, 2
    %vm589 = vcmp.lt.s32.totalorder %v568, 3
    %vm590 = vcmp.lt.s32.totalorder %v568, 4
    %v591 = vsel %vm587, %v571, %v574
    %v592 = vsel %vm590, %v580, 2102212464
    %v593 = vsel %vm589, %v577, %v592
    %v594 = vsel %vm588, %v591, %v593
    %v595 = vsel %vm587, %v574, %v577
    %v596 = vsel %vm590, %v583, 920167782
    %v597 = vsel %vm589, %v580, %v596
    %v598 = vsel %vm588, %v595, %v597
    %v599 = vsel %vm587, %v577, %v580
    %v600 = vsel %vm590, %v586, 1326507024
    %v601 = vsel %vm589, %v583, %v600
    %v602 = vsel %vm588, %v599, %v601
    %v603 = vshll.u32 %v563, 8
    %v604 = vand.u32 %v603, 65535
    %v605 = vshrl.u32 %v603, 16
    %v606 = vand.u32 %v602, 65535
    %v607 = vshrl.u32 %v602, 16
    %v608 = vmul.u32 %v604, %v606
    %v609 = vmul.u32 %v604, %v607
    %v610 = vmul.u32 %v605, %v606
    %v611 = vmul.u32 %v605, %v607
    %v612 = vshll.u32 %v609, 16
    %v613 = vshrl.u32 %v609, 16
    %v614 = vshll.u32 %v610, 16
    %v615 = vshrl.u32 %v610, 16
    %vm616 = vc.u32 %v608, %v612
    %v617 = vsel %vm616, 1, 0
    %v618 = vadd.s32 %v608, %v612
    %v619 = vadd.s32 %v611, %v617
    %vm620 = vc.u32 %v618, %v614
    %v621 = vsel %vm620, 1, 0
    %v622 = vadd.s32 %v618, %v614
    %v623 = vadd.s32 %v619, %v621
    %v624 = vadd.s32 %v623, %v613
    %v625 = vadd.s32 %v624, %v615
    %v626 = vand.u32 %v603, 65535
    %v627 = vshrl.u32 %v603, 16
    %v628 = vand.u32 %v598, 65535
    %v629 = vshrl.u32 %v598, 16
    %v630 = vmul.u32 %v626, %v628
    %v631 = vmul.u32 %v626, %v629
    %v632 = vmul.u32 %v627, %v628
    %v633 = vmul.u32 %v627, %v629
    %v634 = vshll.u32 %v631, 16
    %v635 = vshrl.u32 %v631, 16
    %v636 = vshll.u32 %v632, 16
    %v637 = vshrl.u32 %v632, 16
    %vm638 = vc.u32 %v630, %v634
    %v639 = vsel %vm638, 1, 0
    %v640 = vadd.s32 %v630, %v634
    %v641 = vadd.s32 %v633, %v639
    %vm642 = vc.u32 %v640, %v636
    %v643 = vsel %vm642, 1, 0
    %v644 = vadd.s32 %v640, %v636
    %v645 = vadd.s32 %v641, %v643
    %v646 = vadd.s32 %v645, %v635
    %v647 = vadd.s32 %v646, %v637
    %v648 = vmul.u32 %v603, %v594
    %v649 = vadd.s32 %v625, %v644
    %vm650 = vc.u32 %v625, %v644
    %v651 = vadd.s32 %v647, 1
    %v652 = vsel %vm650, %v651, %v647
    %v653 = vadd.s32 %v648, %v652
    %v654 = vadd.s32 %v653, 536870912
    %v655 = vshrl.u32 %v654, 30
    %v656 = vshll.u32 %v655, 30
    %v657 = vsub.s32 %v653, %v656
    %vm658 = vcmp.lt.s32.totalorder %v657, 0
    %v659 = vsub.s32 0, %v657
    %v660 = vsel %vm658, %v659, %v657
    %v661 = vclz %v660
    %v662 = vsub.s32 %v661, 2
    %vm663 = vcmp.gt.s32.totalorder 0, %v662
    %v664 = vsel %vm663, 0, %v662
    %v665 = vsub.s32 32, %v664
    %v666 = vshll.u32 %v657, %v664
    %v667 = vshrl.u32 %v649, %v665
    %v668 = vor.u32 %v666, %v667
    %v669 = vsub.s32 4294967266, %v664
    %v670 = vadd.s32 %v669, 127
    %v671 = vshll.u32 %v670, 23
    %v672 = vor.u32 4788187, %v671
    %v673 = vand.u32 2147483647, %v672
    %v675 = vcvt.s32.f32 %v668
    %v676 = vmul.f32 %v675, %v673
    %v677 = vxor.u32 %v676, 2147483648
    %v678 = vsel %vm557, %v677, %v676
    %v679 = vsub.s32 4, %v655
    %v680 = vsel %vm557, %v679, %v655
    %v681 = vsel %vm556, %v400, %v678
    %v682 = vsel %vm556, 0, %v680
    %v683 = vmul.f32 %v681, %v681
    %v684 = vmul.f32 %v683, -0.001358992
    %v685 = vadd.f32 %v684, 0.041655596
    %v686 = vmul.f32 %v683, %v685
    %v687 = vadd.f32 %v686, -0.4999988
    %v688 = vmul.f32 %v683, %v687
    %v689 = vadd.f32 1.0, %v688
    %v690 = vmul.f32 %v681, %v681
    %v691 = vmul.f32 %v690, -0.00019511016
    %v692 = vadd.f32 %v691, 0.008332121
    %v693 = vmul.f32 %v690, %v692
    %v694 = vadd.f32 %v693, -0.16666654
    %v695 = vmul.f32 %v690, %v694
    %v696 = vadd.f32 %v695, 1.0
    %v697 = vmul.f32 %v696, %v681
    %vm698 = vweird.f32 %v400
    %v699 = vadd.s32 %v682, 3
    %v700 = vand.u32 %v699, 3
    %vm701 = vcmp.lt.s32.totalorder %v700, 2
    %vm702 = vcmp.eq.s32.totalorder %v700, 0
    %v703 = vxor.u32 %v697, 2147483648
    %v704 = vsel %vm702, %v689, %v703
    %vm705 = vcmp.eq.s32.totalorder %v700, 2
    %v706 = vxor.u32 %v689, 2147483648
    %v707 = vsel %vm705, %v706, %v697
    %v708 = vsel %vm701, %v704, %v707
    %v709 = vsel %vm698, nan, %v708
    %711 = vrot.lane.b32.xlu0 %v400, 124
    %v712 = vpop.permute.xlu0 %711
    %v714 = vadd.f32 %v56, %v712
    %716 = vrot.lane.b32.xlu0 %v554, 124
    %v717 = vpop.permute.xlu0 %716
    %v719 = vmul.f32 %v56, %v717
    %721 = vrot.lane.b32.xlu0 %v709, 125
    %v722 = vpop.permute.xlu0 %721
    %v724 = vmul.f32 %v56, %v722
    %726 = vrot.lane.b32.xlu0 %v724, 127
    %v727 = vpop.permute.xlu0 %726
    %v729 = vadd.f32 %v719, %v727
    %730 = vrot.lane.b32.xlu0 %v554, 125
    %v731 = vpop.permute.xlu0 %730
    %v733 = vmul.f32 %v56, %v731
    %734 = vrot.lane.b32.xlu0 %v709, 124
    %v735 = vpop.permute.xlu0 %734
    %v737 = vmul.f32 %v56, %v735
    %739 = vrot.lane.b32.xlu0 %v737, 1
    %v740 = vpop.permute.xlu0 %739
    %v742 = vsub.f32 %v733, %v740
    %v743 = vmul.f32 %v398, 0.02
    %745 = vrot.lane.b32.xlu0 %v743, 4
    %v746 = vpop.permute.xlu0 %745
    %v748 = vadd.f32 %v56, %v746
    %vm749 = vcmask 15360
    %v750 = vsel %vm749, %v714, %v729
    %v751 = vsel %vm343, %v750, %v742
    %vm752 = vcmask 31744
    %v753 = vsel %vm752, %v751, %v748
    %754 = vst.msk [vmem:[#allocation5] sm:$0xff] %vm63, %v753
    // Predicated region
    $region50: #{tpu_custom_call.1} parent=1 // pred_check
      _
    $region51: #{tpu_custom_call.1} parent=1 // pred_check_branch
      %756 = sbr.rel (0) target = $region53
    $region52: #{tpu_custom_call.1} parent=1 // pred_region
      %758 = vsyncadd [#allocation4], 0
      %s760 = sshll.u32 [#allocation5], 4
      %s761 = int_to_ptr.vmem [resolvable:$true] %s760
      %s762 = sshll.u32 %s11, 4
      %s763 = int_to_ptr.hbm [resolvable:$true] %s762
      %765 = dma.vmem_to_hbm [thread:$0]  %s761, 128, %s763, [#allocation4]
    $region53: #{tpu_custom_call.1} parent=1 // pred_fallthru
      _
    // Predicated region
    $region54: #{tpu_custom_call.1} parent=1 // pred_check
      _
    $region55: #{tpu_custom_call.1} parent=1 // pred_check_branch
      %767 = sbr.rel (0) target = $region57
    $region56: #{tpu_custom_call.1} parent=1 // pred_region
      %769 = dma.done [#allocation4], 128
    $region57: #{tpu_custom_call.1} parent=1 // pred_fallthru
      _
    %770 = vsyncpa [#allocation3], 1
    %771 = vsyncpa [#allocation4], 1

</llo_original>
